<compile_context>
chip_gen: v7x
topology: tpu7x:2x2x1
jax: 0.10.0
libtpu: 0.0.40
codegen_flags: <defaults>
</compile_context>

<pallas_src>
import jax
import jax.numpy as jnp
from jax.experimental import pallas as pl
from jax.experimental.pallas import tpu as pltpu

_LANE = 128
_MAX_TILE = 512     # A-tile edge; sweep 512 / 1024 per generation (1024 on v7x)


def _round_up(v, m):
    return (v + m - 1) // m * m


def _pick_tile(n):
    return min(_MAX_TILE, _round_up(max(n, 1), _LANE))


def _vmem_capacity_bytes():
    try:
        return int(pltpu.get_tpu_info().vmem_capacity_bytes)
    except Exception:
        return 64 * 2**20            # conservative: v7x per-TC physical VMEM


def _vmem_limit(estimate_bytes):
    cap = _vmem_capacity_bytes()
    limit = min(max(2 * estimate_bytes, 32 * 2**20), cap - 4 * 2**20)
    return int(max(limit, estimate_bytes))


# --------------------------------------------------------------------------
# Kernels
# --------------------------------------------------------------------------
def _proj_kernel(xc_ref, w1_ref, z1_ref):
    """Z1 row tile = xc row tile @ W1 (bf16 operands, f32 MXU accumulation)."""
    z1_ref[...] = jnp.dot(
        xc_ref[...], w1_ref[...],
        preferred_element_type=jnp.float32).astype(z1_ref.dtype)


def _agg1_kernel(a_ref, z1_ref, b1_ref, w2_ref, z2_ref, acc_ref):
    """Grid = (row_tile, k_tile). Z2 = ReLU(A @ Z1 + b1) @ W2 for one row tile."""
    k = pl.program_id(1)

    @pl.when(k == 0)
    def _init():
        acc_ref[...] = jnp.zeros_like(acc_ref)

    acc_ref[...] += jnp.dot(a_ref[...], z1_ref[...],
                            preferred_element_type=jnp.float32)

    @pl.when(k == pl.num_programs(1) - 1)
    def _finalize():
        h1 = jnp.maximum(acc_ref[...] + b1_ref[...], 0.0)       # bias + ReLU, f32
        z2_ref[...] = jnp.dot(
            h1.astype(w2_ref.dtype), w2_ref[...],
            preferred_element_type=jnp.float32).astype(z2_ref.dtype)


def _agg2_kernel(a_ref, z2_ref, b2_ref, o_ref, acc_ref):
    """Grid = (row_tile, k_tile). Y = A @ Z2 + b2 for one row tile."""
    k = pl.program_id(1)

    @pl.when(k == 0)
    def _init():
        acc_ref[...] = jnp.zeros_like(acc_ref)

    acc_ref[...] += jnp.dot(a_ref[...], z2_ref[...],
                            preferred_element_type=jnp.float32)

    @pl.when(k == pl.num_programs(1) - 1)
    def _finalize():
        o_ref[...] = (acc_ref[...] + b2_ref[...]).astype(o_ref.dtype)


# --------------------------------------------------------------------------
# set_graph()-time preparation (hoisted out of the per-step forward)
# --------------------------------------------------------------------------
def prepare_adjacency(a_hat):
    """Pad + cast A_hat once (set_graph analogue); reuse across all nfe calls."""
    n = a_hat.shape[0]
    tile = _pick_tile(n)
    n_pad = _round_up(n, tile)
    return jnp.zeros((n_pad, n_pad), jnp.bfloat16).at[:n, :n].set(
        a_hat.astype(jnp.bfloat16))


def prepare_params(w1, b1, w2, b2):
    """Pad + cast the GCN params once; W1 keeps the tight 2H concat packing."""
    two_h, h = w1.shape
    h_pad = _round_up(h, _LANE)
    k2 = _round_up(two_h, _LANE)
    bf = jnp.bfloat16
    w1_p = jnp.zeros((k2, h_pad), bf).at[:two_h, :h].set(w1.astype(bf))
    b1_p = jnp.zeros((1, h_pad), jnp.float32).at[0, :h].set(b1.astype(jnp.float32))
    w2_p = jnp.zeros((h_pad, h_pad), bf).at[:h, :h].set(w2.astype(bf))
    b2_p = jnp.zeros((1, h_pad), jnp.float32).at[0, :h].set(b2.astype(jnp.float32))
    return w1_p, b1_p, w2_p, b2_p


# --------------------------------------------------------------------------
# Forward
# --------------------------------------------------------------------------
@jax.jit
def controlled_gde_forward(x, h0, a_p, w1_p, b1_p, w2_p, b2_p):
    """ControlledGDEFunc forward.

    x, h0 : [N, H]   node features / control features (the `.h0` hook)
    a_p   : [Np, Np] bf16 pre-padded adjacency (from prepare_adjacency)
    w1_p  : [K2, Hp] bf16, b1_p: [1, Hp] f32, w2_p: [Hp, Hp] bf16, b2_p: [1, Hp] f32
    returns [N, H] float32
    """
    n, h = x.shape
    n_pad = a_p.shape[0]
    k2 = w1_p.shape[0]
    h_pad = w2_p.shape[0]
    tile = min(_MAX_TILE, n_pad)
    r_tiles = n_pad // tile
    k_tiles = n_pad // tile
    bf = jnp.bfloat16

    # Tightly packed concat: width 2H, padded once to K2 = round_up(2H, 128).
    xc = jnp.concatenate([x, h0], axis=1).astype(bf)            # [n, 2h]
    xc_p = jnp.zeros((n_pad, k2), bf).at[:n, :2 * h].set(xc)

    # ---- call 1: Z1 = xc @ W1 --------------------------------------------
    proj_vmem = 2 * tile * k2 * 2 + 2 * k2 * h_pad * 2 + 2 * tile * h_pad * 2
    z1 = pl.pallas_call(
        _proj_kernel,
        out_shape=jax.ShapeDtypeStruct((n_pad, h_pad), bf),
        grid_spec=pltpu.PrefetchScalarGridSpec(
            num_scalar_prefetch=0,
            grid=(r_tiles,),
            in_specs=[
                pl.BlockSpec((tile, k2), lambda i: (i, 0)),       # xc row tile
                pl.BlockSpec((k2, h_pad), lambda i: (0, 0)),      # W1 (resident)
            ],
            out_specs=pl.BlockSpec((tile, h_pad), lambda i: (i, 0)),
        ),
        compiler_params=pltpu.CompilerParams(
            dimension_semantics=("parallel",),
            vmem_limit_bytes=_vmem_limit(proj_vmem),
        ),
        cost_estimate=pl.CostEstimate(
            flops=2 * n_pad * k2 * h_pad, transcendentals=0,
            bytes_accessed=n_pad * k2 * 2 + k2 * h_pad * 2 + n_pad * h_pad * 2),
    )(xc_p, w1_p)

    # Shared VMEM / cost accounting for the two A-aggregation calls
    # (includes the silent double-buffers on every streamed operand).
    agg_vmem = (2 * tile * tile * 2            # A tiles, double-buffered
                + 2 * tile * h_pad * 2         # Z tiles, double-buffered
                + 2 * (h_pad + 2) * h_pad * 4  # W2 + biases (conservative x2)
                + 2 * tile * h_pad * 4         # output tiles, double-buffered
                + tile * h_pad * 4)            # f32 K accumulator
    agg_flops = 2 * n_pad * n_pad * h_pad
    agg_bytes = n_pad * n_pad * 2 + 2 * n_pad * h_pad * 2 + h_pad * h_pad * 2

    # ---- call 2: Z2 = ReLU(A @ Z1 + b1) @ W2 ------------------------------
    z2 = pl.pallas_call(
        _agg1_kernel,
        out_shape=jax.ShapeDtypeStruct((n_pad, h_pad), bf),
        grid_spec=pltpu.PrefetchScalarGridSpec(
            num_scalar_prefetch=0,
            grid=(r_tiles, k_tiles),
            in_specs=[
                pl.BlockSpec((tile, tile), lambda i, k: (i, k)),    # A tile
                pl.BlockSpec((tile, h_pad), lambda i, k: (k, 0)),   # Z1 k-tile
                pl.BlockSpec((1, h_pad), lambda i, k: (0, 0)),      # b1
                pl.BlockSpec((h_pad, h_pad), lambda i, k: (0, 0)),  # W2
            ],
            out_specs=pl.BlockSpec((tile, h_pad), lambda i, k: (i, 0)),
            scratch_shapes=[pltpu.VMEM((tile, h_pad), jnp.float32)],
        ),
        compiler_params=pltpu.CompilerParams(
            dimension_semantics=("parallel", "arbitrary"),
            vmem_limit_bytes=_vmem_limit(agg_vmem),
        ),
        cost_estimate=pl.CostEstimate(
            flops=agg_flops + 2 * n_pad * h_pad * h_pad, transcendentals=0,
            bytes_accessed=agg_bytes + h_pad * h_pad * 2),
    )(a_p, z1, b1_p, w2_p)

    # ---- call 3: Y = A @ Z2 + b2 -------------------------------------------
    y = pl.pallas_call(
        _agg2_kernel,
        out_shape=jax.ShapeDtypeStruct((n_pad, h_pad), jnp.float32),
        grid_spec=pltpu.PrefetchScalarGridSpec(
            num_scalar_prefetch=0,
            grid=(r_tiles, k_tiles),
            in_specs=[
                pl.BlockSpec((tile, tile), lambda i, k: (i, k)),    # A tile
                pl.BlockSpec((tile, h_pad), lambda i, k: (k, 0)),   # Z2 k-tile
                pl.BlockSpec((1, h_pad), lambda i, k: (0, 0)),      # b2
            ],
            out_specs=pl.BlockSpec((tile, h_pad), lambda i, k: (i, 0)),
            scratch_shapes=[pltpu.VMEM((tile, h_pad), jnp.float32)],
        ),
        compiler_params=pltpu.CompilerParams(
            dimension_semantics=("parallel", "arbitrary"),
            vmem_limit_bytes=_vmem_limit(agg_vmem),
        ),
        cost_estimate=pl.CostEstimate(
            flops=agg_flops, transcendentals=0,
            bytes_accessed=agg_bytes + n_pad * h_pad * 2),
    )(a_p, z2, b2_p)

    return y[:n, :h]


# --------------------------------------------------------------------------
# References
# --------------------------------------------------------------------------
def _reference_f32(x, h0, a_hat, w1, b1, w2, b2):
    xc = jnp.concatenate([x, h0], axis=1)
    h1 = jnp.maximum(a_hat @ (xc @ w1) + b1, 0.0)
    return a_hat @ (h1 @ w2) + b2


def _reference_bf16(x, h0, a_hat, w1, b1, w2, b2):
    # Mirrors the kernel's bf16 operands / f32 accumulation / bf16 staging.
    bf = jnp.bfloat16
    a = a_hat.astype(bf)
    xc = jnp.concatenate([x, h0], axis=1).astype(bf)
    z1 = jnp.dot(xc, w1.astype(bf), preferred_element_type=jnp.float32).astype(bf)
    h1 = jnp.maximum(jnp.dot(a, z1, preferred_element_type=jnp.float32) + b1, 0.0)
    z2 = jnp.dot(h1.astype(bf), w2.astype(bf),
                 preferred_element_type=jnp.float32).astype(bf)
    return jnp.dot(a, z2, preferred_element_type=jnp.float32) + b2


if __name__ == "__main__":
    # Small, deliberately non-aligned sizes: 200 graph nodes, 32 hidden features.
    N, H = 200, 32
    key = jax.random.PRNGKey(0)
    kx, kh0, ka, kw1, kb1, kw2, kb2 = jax.random.split(key, 7)

    x = jax.random.normal(kx, (N, H), dtype=jnp.float32)
    h0 = jax.random.normal(kh0, (N, H), dtype=jnp.float32)      # the `.h0` hook

    # Synthetic symmetric-normalized adjacency with self-loops.
    adj = (jax.random.uniform(ka, (N, N)) > 0.85).astype(jnp.float32)
    adj = jnp.maximum(adj, adj.T) + jnp.eye(N, dtype=jnp.float32)
    dinv = 1.0 / jnp.sqrt(adj.sum(axis=1))
    a_hat = dinv[:, None] * adj * dinv[None, :]

    # Deterministic GNN parameters (Glorot-ish scale).
    w1 = jax.random.normal(kw1, (2 * H, H), jnp.float32) * (1.0 / jnp.sqrt(2 * H))
    b1 = jax.random.normal(kb1, (H,), jnp.float32) * 0.01
    w2 = jax.random.normal(kw2, (H, H), jnp.float32) * (1.0 / jnp.sqrt(H))
    b2 = jax.random.normal(kb2, (H,), jnp.float32) * 0.01

    # set_graph() analogue: pad/cast A and the params ONCE, reuse per forward.
    a_p = prepare_adjacency(a_hat)
    w1_p, b1_p, w2_p, b2_p = prepare_params(w1, b1, w2, b2)

    out = jax.block_until_ready(
        controlled_gde_forward(x, h0, a_p, w1_p, b1_p, w2_p, b2_p))

    ref_bf16 = _reference_bf16(x, h0, a_hat, w1, b1, w2, b2)
    ref_f32 = _reference_f32(x, h0, a_hat, w1, b1, w2, b2)
    assert out.shape == (N, H)
    assert jnp.allclose(out, ref_bf16, atol=2e-2, rtol=2e-2), \
        "mismatch vs bf16-mirrored reference"
    assert jnp.allclose(out, ref_f32, atol=5e-2, rtol=5e-2), \
        "mismatch vs f32 reference"

    print("KERNEL_OK")
</pallas_src>

<mosaic_0001>
module attributes {stable_mosaic.version = 11 : i64} {
  func.func @_agg1_kernel(%arg0: i32, %arg1: i32, %arg2: memref<256x256xbf16, #tpu.memory_space<vmem>>, %arg3: memref<256x128xbf16, #tpu.memory_space<vmem>>, %arg4: memref<1x128xf32, #tpu.memory_space<vmem>>, %arg5: memref<128x128xbf16, #tpu.memory_space<vmem>>, %arg6: memref<256x128xbf16, #tpu.memory_space<vmem>>, %arg7: memref<256x128xf32, #tpu.memory_space<vmem>>) attributes {dimension_semantics = [#tpu.dimension_semantics<parallel>, #tpu.dimension_semantics<arbitrary>], iteration_bounds = array<i64: 1, 1>, scalar_prefetch = 0 : i64, scratch_operands = 1 : i64, tpu.core_type = #tpu.core_type<tc>, window_params = [{transform_indices = @transform_0, window_bounds = array<i64: 256, 256>}, {transform_indices = @transform_1, window_bounds = array<i64: 256, 128>}, {pipeline_mode = #tpu.pipeline_mode<synchronous>, transform_indices = @transform_2, window_bounds = array<i64: 1, 128>}, {pipeline_mode = #tpu.pipeline_mode<synchronous>, transform_indices = @transform_3, window_bounds = array<i64: 128, 128>}, {transform_indices = @transform_4, window_bounds = array<i64: 256, 128>}]} {
    %c0_i32 = arith.constant 0 : i32
    %0 = arith.cmpi eq, %arg1, %c0_i32 : i32
    %1 = arith.extui %0 : i1 to i32
    %c0_i32_0 = arith.constant 0 : i32
    %2 = arith.cmpi ne, %1, %c0_i32_0 : i32
    scf.if %2 {
      %cst_10 = arith.constant 0.000000e+00 : f32
      %12 = vector.broadcast %cst_10 : f32 to vector<256x128xf32>
      %c0_11 = arith.constant 0 : index
      %c0_12 = arith.constant 0 : index
      %13 = vector.load %arg7[%c0_11, %c0_12] : memref<256x128xf32, #tpu.memory_space<vmem>>, vector<256x128xf32>
      tpu.vector_store %arg7[%c0_11, %c0_12], %12 {strides = array<i32>} : memref<256x128xf32, #tpu.memory_space<vmem>>, vector<256x128xf32>,
    } else {
    }
    %c0 = arith.constant 0 : index
    %c0_1 = arith.constant 0 : index
    %3 = vector.load %arg7[%c0, %c0_1] : memref<256x128xf32, #tpu.memory_space<vmem>>, vector<256x128xf32>
    %c0_2 = arith.constant 0 : index
    %c0_3 = arith.constant 0 : index
    %4 = vector.load %arg2[%c0_2, %c0_3] : memref<256x256xbf16, #tpu.memory_space<vmem>>, vector<256x256xbf16>
    %c0_4 = arith.constant 0 : index
    %c0_5 = arith.constant 0 : index
    %5 = vector.load %arg3[%c0_4, %c0_5] : memref<256x128xbf16, #tpu.memory_space<vmem>>, vector<256x128xbf16>
    %cst = arith.constant dense<0.000000e+00> : vector<256x128xf32>
    %6 = tpu.matmul %4, %5, %cst {dimension_numbers = #tpu.dot_dimension_numbers<[1], [0], [0], [1], [0, 0, 1, 1], [], []>} : vector<256x256xbf16>, vector<256x128xbf16>, vector<256x128xf32> -> vector<256x128xf32>
    %7 = arith.addf %3, %6 : vector<256x128xf32>
    %c0_6 = arith.constant 0 : index
    %c0_7 = arith.constant 0 : index
    %8 = vector.load %arg7[%c0_6, %c0_7] : memref<256x128xf32, #tpu.memory_space<vmem>>, vector<256x128xf32>
    tpu.vector_store %arg7[%c0_6, %c0_7], %7 {strides = array<i32>} : memref<256x128xf32, #tpu.memory_space<vmem>>, vector<256x128xf32>,
    %c0_i32_8 = arith.constant 0 : i32
    %9 = arith.cmpi eq, %arg1, %c0_i32_8 : i32
    %10 = arith.extui %9 : i1 to i32
    %c0_i32_9 = arith.constant 0 : i32
    %11 = arith.cmpi ne, %10, %c0_i32_9 : i32
    scf.if %11 {
      %c0_10 = arith.constant 0 : index
      %c0_11 = arith.constant 0 : index
      %12 = vector.load %arg7[%c0_10, %c0_11] : memref<256x128xf32, #tpu.memory_space<vmem>>, vector<256x128xf32>
      %c0_12 = arith.constant 0 : index
      %c0_13 = arith.constant 0 : index
      %13 = vector.load %arg4[%c0_12, %c0_13] : memref<1x128xf32, #tpu.memory_space<vmem>>, vector<1x128xf32>
      %14 = vector.broadcast %13 : vector<1x128xf32> to vector<256x128xf32>
      %15 = arith.addf %12, %14 : vector<256x128xf32>
      %cst_14 = arith.constant 0.000000e+00 : f32
      %16 = vector.broadcast %cst_14 : f32 to vector<256x128xf32>
      %17 = arith.maximumf %15, %16 : vector<256x128xf32>
      %18 = arith.truncf %17 : vector<256x128xf32> to vector<256x128xbf16>
      %c0_15 = arith.constant 0 : index
      %c0_16 = arith.constant 0 : index
      %19 = vector.load %arg5[%c0_15, %c0_16] : memref<128x128xbf16, #tpu.memory_space<vmem>>, vector<128x128xbf16>
      %cst_17 = arith.constant dense<0.000000e+00> : vector<256x128xf32>
      %20 = tpu.matmul %18, %19, %cst_17 {dimension_numbers = #tpu.dot_dimension_numbers<[1], [0], [0], [1], [0, 0, 1, 1], [], []>} : vector<256x128xbf16>, vector<128x128xbf16>, vector<256x128xf32> -> vector<256x128xf32>
      %21 = arith.truncf %20 : vector<256x128xf32> to vector<256x128xbf16>
      %c0_18 = arith.constant 0 : index
      %c0_19 = arith.constant 0 : index
      %22 = vector.load %arg6[%c0_18, %c0_19] : memref<256x128xbf16, #tpu.memory_space<vmem>>, vector<256x128xbf16>
      tpu.vector_store %arg6[%c0_18, %c0_19], %21 {strides = array<i32>} : memref<256x128xbf16, #tpu.memory_space<vmem>>, vector<256x128xbf16>,
    } else {
    }
    return
  }
  func.func @transform_0(%arg0: i32, %arg1: i32) -> (i32, i32) {
    %c0_i32 = arith.constant 0 : i32
    return %arg0, %arg1 : i32, i32
  }
  func.func @transform_1(%arg0: i32, %arg1: i32) -> (i32, i32) {
    %c0_i32 = arith.constant 0 : i32
    %c0_i32_0 = arith.constant 0 : i32
    return %arg1, %c0_i32 : i32, i32
  }
  func.func @transform_2(%arg0: i32, %arg1: i32) -> (i32, i32) {
    %c0_i32 = arith.constant 0 : i32
    %c0_i32_0 = arith.constant 0 : i32
    %c0_i32_1 = arith.constant 0 : i32
    return %c0_i32, %c0_i32_0 : i32, i32
  }
  func.func @transform_3(%arg0: i32, %arg1: i32) -> (i32, i32) {
    %c0_i32 = arith.constant 0 : i32
    %c0_i32_0 = arith.constant 0 : i32
    %c0_i32_1 = arith.constant 0 : i32
    return %c0_i32, %c0_i32_0 : i32, i32
  }
  func.func @transform_4(%arg0: i32, %arg1: i32) -> (i32, i32) {
    %c0_i32 = arith.constant 0 : i32
    %c0_i32_0 = arith.constant 0 : i32
    return %arg0, %c0_i32 : i32, i32
  }
}

module attributes {stable_mosaic.version = 11 : i64} {
  func.func @_proj_kernel(%arg0: i32, %arg1: memref<256x128xbf16, #tpu.memory_space<vmem>>, %arg2: memref<128x128xbf16, #tpu.memory_space<vmem>>, %arg3: memref<256x128xbf16, #tpu.memory_space<vmem>>) attributes {dimension_semantics = [#tpu.dimension_semantics<parallel>], iteration_bounds = array<i64: 1>, scalar_prefetch = 0 : i64, scratch_operands = 0 : i64, tpu.core_type = #tpu.core_type<tc>, window_params = [{transform_indices = @transform_0, window_bounds = array<i64: 256, 128>}, {pipeline_mode = #tpu.pipeline_mode<synchronous>, transform_indices = @transform_1, window_bounds = array<i64: 128, 128>}, {transform_indices = @transform_2, window_bounds = array<i64: 256, 128>}]} {
    %c0 = arith.constant 0 : index
    %c0_0 = arith.constant 0 : index
    %0 = vector.load %arg1[%c0, %c0_0] : memref<256x128xbf16, #tpu.memory_space<vmem>>, vector<256x128xbf16>
    %c0_1 = arith.constant 0 : index
    %c0_2 = arith.constant 0 : index
    %1 = vector.load %arg2[%c0_1, %c0_2] : memref<128x128xbf16, #tpu.memory_space<vmem>>, vector<128x128xbf16>
    %cst = arith.constant dense<0.000000e+00> : vector<256x128xf32>
    %2 = tpu.matmul %0, %1, %cst {dimension_numbers = #tpu.dot_dimension_numbers<[1], [0], [0], [1], [0, 0, 1, 1], [], []>} : vector<256x128xbf16>, vector<128x128xbf16>, vector<256x128xf32> -> vector<256x128xf32>
    %3 = arith.truncf %2 : vector<256x128xf32> to vector<256x128xbf16>
    %c0_3 = arith.constant 0 : index
    %c0_4 = arith.constant 0 : index
    %4 = vector.load %arg3[%c0_3, %c0_4] : memref<256x128xbf16, #tpu.memory_space<vmem>>, vector<256x128xbf16>
    tpu.vector_store %arg3[%c0_3, %c0_4], %3 {strides = array<i32>} : memref<256x128xbf16, #tpu.memory_space<vmem>>, vector<256x128xbf16>,
    return
  }
  func.func @transform_0(%arg0: i32) -> (i32, i32) {
    %c0_i32 = arith.constant 0 : i32
    %c0_i32_0 = arith.constant 0 : i32
    return %arg0, %c0_i32 : i32, i32
  }
  func.func @transform_1(%arg0: i32) -> (i32, i32) {
    %c0_i32 = arith.constant 0 : i32
    %c0_i32_0 = arith.constant 0 : i32
    %c0_i32_1 = arith.constant 0 : i32
    return %c0_i32, %c0_i32_0 : i32, i32
  }
  func.func @transform_2(%arg0: i32) -> (i32, i32) {
    %c0_i32 = arith.constant 0 : i32
    %c0_i32_0 = arith.constant 0 : i32
    return %arg0, %c0_i32 : i32, i32
  }
}

module attributes {stable_mosaic.version = 11 : i64} {
  func.func @_agg2_kernel(%arg0: i32, %arg1: i32, %arg2: memref<256x256xbf16, #tpu.memory_space<vmem>>, %arg3: memref<256x128xbf16, #tpu.memory_space<vmem>>, %arg4: memref<1x128xf32, #tpu.memory_space<vmem>>, %arg5: memref<256x128xf32, #tpu.memory_space<vmem>>, %arg6: memref<256x128xf32, #tpu.memory_space<vmem>>) attributes {dimension_semantics = [#tpu.dimension_semantics<parallel>, #tpu.dimension_semantics<arbitrary>], iteration_bounds = array<i64: 1, 1>, scalar_prefetch = 0 : i64, scratch_operands = 1 : i64, tpu.core_type = #tpu.core_type<tc>, window_params = [{transform_indices = @transform_0, window_bounds = array<i64: 256, 256>}, {transform_indices = @transform_1, window_bounds = array<i64: 256, 128>}, {pipeline_mode = #tpu.pipeline_mode<synchronous>, transform_indices = @transform_2, window_bounds = array<i64: 1, 128>}, {transform_indices = @transform_3, window_bounds = array<i64: 256, 128>}]} {
    %c0_i32 = arith.constant 0 : i32
    %0 = arith.cmpi eq, %arg1, %c0_i32 : i32
    %1 = arith.extui %0 : i1 to i32
    %c0_i32_0 = arith.constant 0 : i32
    %2 = arith.cmpi ne, %1, %c0_i32_0 : i32
    scf.if %2 {
      %cst_10 = arith.constant 0.000000e+00 : f32
      %12 = vector.broadcast %cst_10 : f32 to vector<256x128xf32>
      %c0_11 = arith.constant 0 : index
      %c0_12 = arith.constant 0 : index
      %13 = vector.load %arg6[%c0_11, %c0_12] : memref<256x128xf32, #tpu.memory_space<vmem>>, vector<256x128xf32>
      tpu.vector_store %arg6[%c0_11, %c0_12], %12 {strides = array<i32>} : memref<256x128xf32, #tpu.memory_space<vmem>>, vector<256x128xf32>,
    } else {
    }
    %c0 = arith.constant 0 : index
    %c0_1 = arith.constant 0 : index
    %3 = vector.load %arg6[%c0, %c0_1] : memref<256x128xf32, #tpu.memory_space<vmem>>, vector<256x128xf32>
    %c0_2 = arith.constant 0 : index
    %c0_3 = arith.constant 0 : index
    %4 = vector.load %arg2[%c0_2, %c0_3] : memref<256x256xbf16, #tpu.memory_space<vmem>>, vector<256x256xbf16>
    %c0_4 = arith.constant 0 : index
    %c0_5 = arith.constant 0 : index
    %5 = vector.load %arg3[%c0_4, %c0_5] : memref<256x128xbf16, #tpu.memory_space<vmem>>, vector<256x128xbf16>
    %cst = arith.constant dense<0.000000e+00> : vector<256x128xf32>
    %6 = tpu.matmul %4, %5, %cst {dimension_numbers = #tpu.dot_dimension_numbers<[1], [0], [0], [1], [0, 0, 1, 1], [], []>} : vector<256x256xbf16>, vector<256x128xbf16>, vector<256x128xf32> -> vector<256x128xf32>
    %7 = arith.addf %3, %6 : vector<256x128xf32>
    %c0_6 = arith.constant 0 : index
    %c0_7 = arith.constant 0 : index
    %8 = vector.load %arg6[%c0_6, %c0_7] : memref<256x128xf32, #tpu.memory_space<vmem>>, vector<256x128xf32>
    tpu.vector_store %arg6[%c0_6, %c0_7], %7 {strides = array<i32>} : memref<256x128xf32, #tpu.memory_space<vmem>>, vector<256x128xf32>,
    %c0_i32_8 = arith.constant 0 : i32
    %9 = arith.cmpi eq, %arg1, %c0_i32_8 : i32
    %10 = arith.extui %9 : i1 to i32
    %c0_i32_9 = arith.constant 0 : i32
    %11 = arith.cmpi ne, %10, %c0_i32_9 : i32
    scf.if %11 {
      %c0_10 = arith.constant 0 : index
      %c0_11 = arith.constant 0 : index
      %12 = vector.load %arg6[%c0_10, %c0_11] : memref<256x128xf32, #tpu.memory_space<vmem>>, vector<256x128xf32>
      %c0_12 = arith.constant 0 : index
      %c0_13 = arith.constant 0 : index
      %13 = vector.load %arg4[%c0_12, %c0_13] : memref<1x128xf32, #tpu.memory_space<vmem>>, vector<1x128xf32>
      %14 = vector.broadcast %13 : vector<1x128xf32> to vector<256x128xf32>
      %15 = arith.addf %12, %14 : vector<256x128xf32>
      %c0_14 = arith.constant 0 : index
      %c0_15 = arith.constant 0 : index
      %16 = vector.load %arg5[%c0_14, %c0_15] : memref<256x128xf32, #tpu.memory_space<vmem>>, vector<256x128xf32>
      tpu.vector_store %arg5[%c0_14, %c0_15], %15 {strides = array<i32>} : memref<256x128xf32, #tpu.memory_space<vmem>>, vector<256x128xf32>,
    } else {
    }
    return
  }
  func.func @transform_0(%arg0: i32, %arg1: i32) -> (i32, i32) {
    %c0_i32 = arith.constant 0 : i32
    return %arg0, %arg1 : i32, i32
  }
  func.func @transform_1(%arg0: i32, %arg1: i32) -> (i32, i32) {
    %c0_i32 = arith.constant 0 : i32
    %c0_i32_0 = arith.constant 0 : i32
    return %arg1, %c0_i32 : i32, i32
  }
  func.func @transform_2(%arg0: i32, %arg1: i32) -> (i32, i32) {
    %c0_i32 = arith.constant 0 : i32
    %c0_i32_0 = arith.constant 0 : i32
    %c0_i32_1 = arith.constant 0 : i32
    return %c0_i32, %c0_i32_0 : i32, i32
  }
  func.func @transform_3(%arg0: i32, %arg1: i32) -> (i32, i32) {
    %c0_i32 = arith.constant 0 : i32
    %c0_i32_0 = arith.constant 0 : i32
    return %arg0, %c0_i32 : i32, i32
  }
}

</mosaic_0001>

<llo_original>
// kernel: controlled_gde_forward.3
$region0: #{controlled_gde_forward.3}
  #allocation0 [shape = 'u32[]', space=smem, size = 0x4, offset = 0x4, fixed_abs, tag = 'smem constant byte address 0x4 - core index']
  #allocation1 [shape = 'u32[144,128]{1,0:T(1,128)}', space=vmem, size = 0x12000, scoped, tag = 'internal scratch']
  %s0 = inlined_call_operand.vmem [shape: bf16[256,128], index: 0, kind: input, shape index: {}]
  %s1 = inlined_call_operand.vmem [shape: bf16[128,128], index: 1, kind: input, shape index: {}]
  %s2 = inlined_call_operand.vmem [shape: bf16[256,128], index: 2, kind: output, shape index: {}]
  %s3 = sld [smem:[#allocation0]]
  $region18: #{controlled_gde_forward.3} parent=0
    _
  %s5 = ssub.s32 1, %s3
  %s6 = scalar_select 0, %s5, %s3
  // Predicated region
  $region2: #{controlled_gde_forward.3} parent=0 // pred_check
    _
  $region3: #{controlled_gde_forward.3} parent=0 // pred_check_branch
    %8 = sbr.rel (0) target = $region5
  $region4: #{controlled_gde_forward.3} parent=0 // pred_region
    _
  $region5: #{controlled_gde_forward.3} parent=0 // pred_fallthru
    _
  // Predicated region
  $region6: #{controlled_gde_forward.3} parent=0 // pred_check
    _
  $region7: #{controlled_gde_forward.3} parent=0 // pred_check_branch
    %10 = sbr.rel (0) target = $region9
  $region8: #{controlled_gde_forward.3} parent=0 // pred_region
    _
  $region9: #{controlled_gde_forward.3} parent=0 // pred_fallthru
    _
  %v12 = vld [vmem:[%s0] sm:$0xf]
  %v13 = vld [vmem:[%s0 + $0x4] sm:$0xf]
  %v14 = vld [vmem:[%s0 + $0x8] sm:$0xf]
  %v15 = vld [vmem:[%s0 + $0xc] sm:$0xf]
  %v16 = vld [vmem:[%s0 + $0x10] sm:$0xf]
  %v17 = vld [vmem:[%s0 + $0x14] sm:$0xf]
  %v18 = vld [vmem:[%s0 + $0x18] sm:$0xf]
  %v19 = vld [vmem:[%s0 + $0x1c] sm:$0xf]
  %v20 = vld [vmem:[%s0 + $0x20] sm:$0xf]
  %v21 = vld [vmem:[%s0 + $0x24] sm:$0xf]
  %v22 = vld [vmem:[%s0 + $0x28] sm:$0xf]
  %v23 = vld [vmem:[%s0 + $0x2c] sm:$0xf]
  %v24 = vld [vmem:[%s0 + $0x30] sm:$0xf]
  %v25 = vld [vmem:[%s0 + $0x34] sm:$0xf]
  %v26 = vld [vmem:[%s0 + $0x38] sm:$0xf]
  %v27 = vld [vmem:[%s0 + $0x3c] sm:$0xf]
  %v28 = vld [vmem:[%s0 + $0x40] sm:$0xf]
  %v29 = vld [vmem:[%s0 + $0x44] sm:$0xf]
  %v30 = vld [vmem:[%s0 + $0x48] sm:$0xf]
  %v31 = vld [vmem:[%s0 + $0x4c] sm:$0xf]
  %v32 = vld [vmem:[%s0 + $0x50] sm:$0xf]
  %v33 = vld [vmem:[%s0 + $0x54] sm:$0xf]
  %v34 = vld [vmem:[%s0 + $0x58] sm:$0xf]
  %v35 = vld [vmem:[%s0 + $0x5c] sm:$0xf]
  %v36 = vld [vmem:[%s0 + $0x60] sm:$0xf]
  %v37 = vld [vmem:[%s0 + $0x64] sm:$0xf]
  %v38 = vld [vmem:[%s0 + $0x68] sm:$0xf]
  %v39 = vld [vmem:[%s0 + $0x6c] sm:$0xf]
  %v40 = vld [vmem:[%s0 + $0x70] sm:$0xf]
  %v41 = vld [vmem:[%s0 + $0x74] sm:$0xf]
  %v42 = vld [vmem:[%s0 + $0x78] sm:$0xf]
  %v43 = vld [vmem:[%s0 + $0x7c] sm:$0xf]
  %v44 = vld [vmem:[%s1] sm:$0xf]
  %v45 = vld [vmem:[%s1 + $0x4] sm:$0xf]
  %v46 = vld [vmem:[%s1 + $0x8] sm:$0xf]
  %v47 = vld [vmem:[%s1 + $0xc] sm:$0xf]
  %v48 = vld [vmem:[%s1 + $0x10] sm:$0xf]
  %v49 = vld [vmem:[%s1 + $0x14] sm:$0xf]
  %v50 = vld [vmem:[%s1 + $0x18] sm:$0xf]
  %v51 = vld [vmem:[%s1 + $0x1c] sm:$0xf]
  %v52 = vld [vmem:[%s1 + $0x20] sm:$0xf]
  %v53 = vld [vmem:[%s1 + $0x24] sm:$0xf]
  %v54 = vld [vmem:[%s1 + $0x28] sm:$0xf]
  %v55 = vld [vmem:[%s1 + $0x2c] sm:$0xf]
  %v56 = vld [vmem:[%s1 + $0x30] sm:$0xf]
  %v57 = vld [vmem:[%s1 + $0x34] sm:$0xf]
  %v58 = vld [vmem:[%s1 + $0x38] sm:$0xf]
  %v59 = vld [vmem:[%s1 + $0x3c] sm:$0xf]
  %v92 = vunpack.c.l.b16 %v12
  %v93 = vunpack.c.l.b16 %v13
  %v94 = vunpack.c.l.b16 %v14
  %v95 = vunpack.c.l.b16 %v15
  %v96 = vunpack.c.l.b16 %v16
  %v97 = vunpack.c.l.b16 %v17
  %v98 = vunpack.c.l.b16 %v18
  %v99 = vunpack.c.l.b16 %v19
  %v100 = vunpack.c.l.b16 %v20
  %v101 = vunpack.c.l.b16 %v21
  %v102 = vunpack.c.l.b16 %v22
  %v103 = vunpack.c.l.b16 %v23
  %v104 = vunpack.c.l.b16 %v24
  %v105 = vunpack.c.l.b16 %v25
  %v106 = vunpack.c.l.b16 %v26
  %v107 = vunpack.c.l.b16 %v27
  %v108 = vunpack.c.l.b16 %v28
  %v109 = vunpack.c.l.b16 %v29
  %v110 = vunpack.c.l.b16 %v30
  %v111 = vunpack.c.l.b16 %v31
  %v112 = vunpack.c.l.b16 %v32
  %v113 = vunpack.c.l.b16 %v33
  %v114 = vunpack.c.l.b16 %v34
  %v115 = vunpack.c.l.b16 %v35
  %v116 = vunpack.c.l.b16 %v36
  %v117 = vunpack.c.l.b16 %v37
  %v118 = vunpack.c.l.b16 %v38
  %v119 = vunpack.c.l.b16 %v39
  %v120 = vunpack.c.l.b16 %v40
  %v121 = vunpack.c.l.b16 %v41
  %v122 = vunpack.c.l.b16 %v42
  %v123 = vunpack.c.l.b16 %v43
  %v124 = vpack.c.b16 %v93, %v92
  %v125 = vpack.c.b16 %v95, %v94
  %v126 = vpack.c.b16 %v97, %v96
  %v127 = vpack.c.b16 %v99, %v98
  %v128 = vpack.c.b16 %v101, %v100
  %v129 = vpack.c.b16 %v103, %v102
  %v130 = vpack.c.b16 %v105, %v104
  %v131 = vpack.c.b16 %v107, %v106
  %v132 = vpack.c.b16 %v109, %v108
  %v133 = vpack.c.b16 %v111, %v110
  %v134 = vpack.c.b16 %v113, %v112
  %v135 = vpack.c.b16 %v115, %v114
  %v136 = vpack.c.b16 %v117, %v116
  %v137 = vpack.c.b16 %v119, %v118
  %v138 = vpack.c.b16 %v121, %v120
  %v139 = vpack.c.b16 %v123, %v122
  %v172 = vunpack.c.l.b16 %v44
  %v173 = vunpack.c.l.b16 %v45
  %v174 = vunpack.c.l.b16 %v46
  %v175 = vunpack.c.l.b16 %v47
  %v176 = vunpack.c.l.b16 %v48
  %v177 = vunpack.c.l.b16 %v49
  %v178 = vunpack.c.l.b16 %v50
  %v179 = vunpack.c.l.b16 %v51
  %v180 = vunpack.c.l.b16 %v52
  %v181 = vunpack.c.l.b16 %v53
  %v182 = vunpack.c.l.b16 %v54
  %v183 = vunpack.c.l.b16 %v55
  %v184 = vunpack.c.l.b16 %v56
  %v185 = vunpack.c.l.b16 %v57
  %v186 = vunpack.c.l.b16 %v58
  %v187 = vunpack.c.l.b16 %v59
  %v188 = vpack.c.b16 %v173, %v172
  %v189 = vpack.c.b16 %v175, %v174
  %v190 = vpack.c.b16 %v177, %v176
  %v191 = vpack.c.b16 %v179, %v178
  %v192 = vpack.c.b16 %v181, %v180
  %v193 = vpack.c.b16 %v183, %v182
  %v194 = vpack.c.b16 %v185, %v184
  %v195 = vpack.c.b16 %v187, %v186
  %204 = vmatprep.subr.bf16.mxu0 0
  %205 = vmatpush1.bf16.msra.mxu0 %v188
  %206 = vmatprep.subr.bf16.mxu0 0
  %207 = vmatpush1.bf16.msra.mxu0 %v189
  %208 = vmatprep.subr.bf16.mxu0 0
  %209 = vmatpush1.bf16.msra.mxu0 %v190
  %210 = vmatprep.subr.bf16.mxu0 0
  %211 = vmatpush1.bf16.msra.mxu0 %v191
  %212 = vmatprep.subr.bf16.mxu0 0
  %213 = vmatpush1.bf16.msra.mxu0 %v192
  %214 = vmatprep.subr.bf16.mxu0 0
  %215 = vmatpush1.bf16.msra.mxu0 %v193
  %216 = vmatprep.subr.bf16.mxu0 0
  %217 = vmatpush1.bf16.msra.mxu0 %v194
  %218 = vmatprep.subr.bf16.mxu0 0
  %219 = vmatpush1.bf16.msra.mxu0 %v195
  %220 = vmatprep.subr.bf16.mxu0 0
  %221 = vmatpush1.bf16.msra.mxu0 0
  %222 = vmatprep.subr.bf16.mxu0 0
  %223 = vmatpush1.bf16.msra.mxu0 0
  %224 = vmatprep.subr.bf16.mxu0 0
  %225 = vmatpush1.bf16.msra.mxu0 0
  %226 = vmatprep.subr.bf16.mxu0 0
  %227 = vmatpush1.bf16.msra.mxu0 0
  %228 = vmatprep.subr.bf16.mxu0 0
  %229 = vmatpush1.bf16.msra.mxu0 0
  %230 = vmatprep.subr.bf16.mxu0 0
  %231 = vmatpush1.bf16.msra.mxu0 0
  %232 = vmatprep.subr.bf16.mxu0 0
  %233 = vmatpush1.bf16.msra.mxu0 0
  %234 = vmatprep.subr.bf16.mxu0 0
  %235 = vmatpush1.bf16.msra.mxu0 0
  %236 = vmatprep.mubr.bf16.mxu0 0
  %237 = vmatmul.mubr.bf16.gmra.mrb[0].mxu0 %v124
  %v238 = vpop.f32.mrb[0].mxu0
  %v239 = vadd.f32 0.0, %v238
  %v240 = vpop.f32.mrb[0].mxu0
  %v241 = vpop.f32.mrb[0].mxu0
  %v242 = vadd.f32 0.0, %v241
  %v243 = vpop.f32.mrb[0].mxu0
  %244 = vmatprep.mubr.bf16.mxu0 0
  %245 = vmatmul.mubr.bf16.gmra.mrb[0].mxu0 %v125
  %v246 = vpop.f32.mrb[0].mxu0
  %v247 = vadd.f32 0.0, %v246
  %v248 = vpop.f32.mrb[0].mxu0
  %v249 = vpop.f32.mrb[0].mxu0
  %v250 = vadd.f32 0.0, %v249
  %v251 = vpop.f32.mrb[0].mxu0
  %252 = vmatprep.mubr.bf16.mxu0 0
  %253 = vmatmul.mubr.bf16.gmra.mrb[0].mxu0 %v126
  %v254 = vpop.f32.mrb[0].mxu0
  %v255 = vadd.f32 0.0, %v254
  %v256 = vpop.f32.mrb[0].mxu0
  %v257 = vpop.f32.mrb[0].mxu0
  %v258 = vadd.f32 0.0, %v257
  %v259 = vpop.f32.mrb[0].mxu0
  %260 = vmatprep.mubr.bf16.mxu0 0
  %261 = vmatmul.mubr.bf16.gmra.mrb[0].mxu0 %v127
  %v262 = vpop.f32.mrb[0].mxu0
  %v263 = vadd.f32 0.0, %v262
  %v264 = vpop.f32.mrb[0].mxu0
  %v265 = vpop.f32.mrb[0].mxu0
  %v266 = vadd.f32 0.0, %v265
  %v267 = vpop.f32.mrb[0].mxu0
  %268 = vmatprep.mubr.bf16.mxu0 0
  %269 = vmatmul.mubr.bf16.gmra.mrb[0].mxu0 %v128
  %v270 = vpop.f32.mrb[0].mxu0
  %v271 = vadd.f32 0.0, %v270
  %v272 = vpop.f32.mrb[0].mxu0
  %v273 = vpop.f32.mrb[0].mxu0
  %v274 = vadd.f32 0.0, %v273
  %v275 = vpop.f32.mrb[0].mxu0
  %276 = vmatprep.mubr.bf16.mxu0 0
  %277 = vmatmul.mubr.bf16.gmra.mrb[0].mxu0 %v129
  %v278 = vpop.f32.mrb[0].mxu0
  %v279 = vadd.f32 0.0, %v278
  %v280 = vpop.f32.mrb[0].mxu0
  %v281 = vpop.f32.mrb[0].mxu0
  %v282 = vadd.f32 0.0, %v281
  %v283 = vpop.f32.mrb[0].mxu0
  %284 = vmatprep.mubr.bf16.mxu0 0
  %285 = vmatmul.mubr.bf16.gmra.mrb[0].mxu0 %v130
  %v286 = vpop.f32.mrb[0].mxu0
  %v287 = vadd.f32 0.0, %v286
  %v288 = vpop.f32.mrb[0].mxu0
  %v289 = vpop.f32.mrb[0].mxu0
  %v290 = vadd.f32 0.0, %v289
  %v291 = vpop.f32.mrb[0].mxu0
  %292 = vmatprep.mubr.bf16.mxu0 0
  %293 = vmatmul.mubr.bf16.gmra.mrb[0].mxu0 %v131
  %v294 = vpop.f32.mrb[0].mxu0
  %v295 = vadd.f32 0.0, %v294
  %v296 = vpop.f32.mrb[0].mxu0
  %v297 = vpop.f32.mrb[0].mxu0
  %v298 = vadd.f32 0.0, %v297
  %v299 = vpop.f32.mrb[0].mxu0
  %300 = vmatprep.mubr.bf16.mxu0 0
  %301 = vmatmul.mubr.bf16.gmra.mrb[0].mxu0 %v132
  %v302 = vpop.f32.mrb[0].mxu0
  %v303 = vadd.f32 0.0, %v302
  %v304 = vpop.f32.mrb[0].mxu0
  %v305 = vpop.f32.mrb[0].mxu0
  %v306 = vadd.f32 0.0, %v305
  %v307 = vpop.f32.mrb[0].mxu0
  %308 = vmatprep.mubr.bf16.mxu0 0
  %309 = vmatmul.mubr.bf16.gmra.mrb[0].mxu0 %v133
  %v310 = vpop.f32.mrb[0].mxu0
  %v311 = vadd.f32 0.0, %v310
  %v312 = vpop.f32.mrb[0].mxu0
  %v313 = vpop.f32.mrb[0].mxu0
  %v314 = vadd.f32 0.0, %v313
  %v315 = vpop.f32.mrb[0].mxu0
  %316 = vmatprep.mubr.bf16.mxu0 0
  %317 = vmatmul.mubr.bf16.gmra.mrb[0].mxu0 %v134
  %v318 = vpop.f32.mrb[0].mxu0
  %v319 = vadd.f32 0.0, %v318
  %v320 = vpop.f32.mrb[0].mxu0
  %v321 = vpop.f32.mrb[0].mxu0
  %v322 = vadd.f32 0.0, %v321
  %v323 = vpop.f32.mrb[0].mxu0
  %324 = vmatprep.mubr.bf16.mxu0 0
  %325 = vmatmul.mubr.bf16.gmra.mrb[0].mxu0 %v135
  %v326 = vpop.f32.mrb[0].mxu0
  %v327 = vadd.f32 0.0, %v326
  %v328 = vpop.f32.mrb[0].mxu0
  %v329 = vpop.f32.mrb[0].mxu0
  %v330 = vadd.f32 0.0, %v329
  %v331 = vpop.f32.mrb[0].mxu0
  %332 = vmatprep.mubr.bf16.mxu0 0
  %333 = vmatmul.mubr.bf16.gmra.mrb[0].mxu0 %v136
  %v334 = vpop.f32.mrb[0].mxu0
  %v335 = vadd.f32 0.0, %v334
  %v336 = vpop.f32.mrb[0].mxu0
  %v337 = vpop.f32.mrb[0].mxu0
  %v338 = vadd.f32 0.0, %v337
  %v339 = vpop.f32.mrb[0].mxu0
  %340 = vmatprep.mubr.bf16.mxu0 0
  %341 = vmatmul.mubr.bf16.gmra.mrb[0].mxu0 %v137
  %v342 = vpop.f32.mrb[0].mxu0
  %v343 = vadd.f32 0.0, %v342
  %v344 = vpop.f32.mrb[0].mxu0
  %v345 = vpop.f32.mrb[0].mxu0
  %v346 = vadd.f32 0.0, %v345
  %v347 = vpop.f32.mrb[0].mxu0
  %348 = vmatprep.mubr.bf16.mxu0 0
  %349 = vmatmul.mubr.bf16.gmra.mrb[0].mxu0 %v138
  %v350 = vpop.f32.mrb[0].mxu0
  %v351 = vadd.f32 0.0, %v350
  %v352 = vpop.f32.mrb[0].mxu0
  %v353 = vpop.f32.mrb[0].mxu0
  %v354 = vadd.f32 0.0, %v353
  %v355 = vpop.f32.mrb[0].mxu0
  %356 = vmatprep.mubr.bf16.mxu0 0
  %357 = vmatmul.mubr.bf16.gmra.mrb[0].mxu0 %v139
  %v358 = vpop.f32.mrb[0].mxu0
  %v359 = vadd.f32 0.0, %v358
  %v360 = vpop.f32.mrb[0].mxu0
  %v361 = vpop.f32.mrb[0].mxu0
  %v362 = vadd.f32 0.0, %v361
  %v363 = vpop.f32.mrb[0].mxu0
  %364 = vdwg.mxu0
  %v365 = vpack.c.bf16 %v242, %v239
  %v366 = vpack.c.bf16 %v250, %v247
  %v367 = vpack.c.bf16 %v258, %v255
  %v368 = vpack.c.bf16 %v266, %v263
  %v369 = vpack.c.bf16 %v274, %v271
  %v370 = vpack.c.bf16 %v282, %v279
  %v371 = vpack.c.bf16 %v290, %v287
  %v372 = vpack.c.bf16 %v298, %v295
  %v373 = vpack.c.bf16 %v306, %v303
  %v374 = vpack.c.bf16 %v314, %v311
  %v375 = vpack.c.bf16 %v322, %v319
  %v376 = vpack.c.bf16 %v330, %v327
  %v377 = vpack.c.bf16 %v338, %v335
  %v378 = vpack.c.bf16 %v346, %v343
  %v379 = vpack.c.bf16 %v354, %v351
  %v380 = vpack.c.bf16 %v362, %v359
  %v397 = vunpack.c.l.b16 %v365
  %v398 = vunpack.c.h.b16 %v365
  %v399 = vunpack.c.l.b16 %v366
  %v400 = vunpack.c.h.b16 %v366
  %v401 = vunpack.c.l.b16 %v367
  %v402 = vunpack.c.h.b16 %v367
  %v403 = vunpack.c.l.b16 %v368
  %v404 = vunpack.c.h.b16 %v368
  %v405 = vunpack.c.l.b16 %v369
  %v406 = vunpack.c.h.b16 %v369
  %v407 = vunpack.c.l.b16 %v370
  %v408 = vunpack.c.h.b16 %v370
  %v409 = vunpack.c.l.b16 %v371
  %v410 = vunpack.c.h.b16 %v371
  %v411 = vunpack.c.l.b16 %v372
  %v412 = vunpack.c.h.b16 %v372
  %v413 = vunpack.c.l.b16 %v373
  %v414 = vunpack.c.h.b16 %v373
  %v415 = vunpack.c.l.b16 %v374
  %v416 = vunpack.c.h.b16 %v374
  %v417 = vunpack.c.l.b16 %v375
  %v418 = vunpack.c.h.b16 %v375
  %v419 = vunpack.c.l.b16 %v376
  %v420 = vunpack.c.h.b16 %v376
  %v421 = vunpack.c.l.b16 %v377
  %v422 = vunpack.c.h.b16 %v377
  %v423 = vunpack.c.l.b16 %v378
  %v424 = vunpack.c.h.b16 %v378
  %v425 = vunpack.c.l.b16 %v379
  %v426 = vunpack.c.h.b16 %v379
  %v427 = vunpack.c.l.b16 %v380
  %v428 = vunpack.c.h.b16 %v380
  %v429 = vpack.c.b16 %v397, %v397
  %v430 = vpack.c.b16 %v398, %v398
  %v431 = vpack.c.b16 %v399, %v399
  %v432 = vpack.c.b16 %v400, %v400
  %v433 = vpack.c.b16 %v401, %v401
  %v434 = vpack.c.b16 %v402, %v402
  %v435 = vpack.c.b16 %v403, %v403
  %v436 = vpack.c.b16 %v404, %v404
  %v437 = vpack.c.b16 %v405, %v405
  %v438 = vpack.c.b16 %v406, %v406
  %v439 = vpack.c.b16 %v407, %v407
  %v440 = vpack.c.b16 %v408, %v408
  %v441 = vpack.c.b16 %v409, %v409
  %v442 = vpack.c.b16 %v410, %v410
  %v443 = vpack.c.b16 %v411, %v411
  %v444 = vpack.c.b16 %v412, %v412
  %v445 = vpack.c.b16 %v413, %v413
  %v446 = vpack.c.b16 %v414, %v414
  %v447 = vpack.c.b16 %v415, %v415
  %v448 = vpack.c.b16 %v416, %v416
  %v449 = vpack.c.b16 %v417, %v417
  %v450 = vpack.c.b16 %v418, %v418
  %v451 = vpack.c.b16 %v419, %v419
  %v452 = vpack.c.b16 %v420, %v420
  %v453 = vpack.c.b16 %v421, %v421
  %v454 = vpack.c.b16 %v422, %v422
  %v455 = vpack.c.b16 %v423, %v423
  %v456 = vpack.c.b16 %v424, %v424
  %v457 = vpack.c.b16 %v425, %v425
  %v458 = vpack.c.b16 %v426, %v426
  %v459 = vpack.c.b16 %v427, %v427
  %v460 = vpack.c.b16 %v428, %v428
  %493 = vst [vmem:[%s2] sm:$0xf] %v429
  %494 = vst [vmem:[%s2 + $0x4] sm:$0xf] %v430
  %495 = vst [vmem:[%s2 + $0x8] sm:$0xf] %v431
  %496 = vst [vmem:[%s2 + $0xc] sm:$0xf] %v432
  %497 = vst [vmem:[%s2 + $0x10] sm:$0xf] %v433
  %498 = vst [vmem:[%s2 + $0x14] sm:$0xf] %v434
  %499 = vst [vmem:[%s2 + $0x18] sm:$0xf] %v435
  %500 = vst [vmem:[%s2 + $0x1c] sm:$0xf] %v436
  %501 = vst [vmem:[%s2 + $0x20] sm:$0xf] %v437
  %502 = vst [vmem:[%s2 + $0x24] sm:$0xf] %v438
  %503 = vst [vmem:[%s2 + $0x28] sm:$0xf] %v439
  %504 = vst [vmem:[%s2 + $0x2c] sm:$0xf] %v440
  %505 = vst [vmem:[%s2 + $0x30] sm:$0xf] %v441
  %506 = vst [vmem:[%s2 + $0x34] sm:$0xf] %v442
  %507 = vst [vmem:[%s2 + $0x38] sm:$0xf] %v443
  %508 = vst [vmem:[%s2 + $0x3c] sm:$0xf] %v444
  %509 = vst [vmem:[%s2 + $0x40] sm:$0xf] %v445
  %510 = vst [vmem:[%s2 + $0x44] sm:$0xf] %v446
  %511 = vst [vmem:[%s2 + $0x48] sm:$0xf] %v447
  %512 = vst [vmem:[%s2 + $0x4c] sm:$0xf] %v448
  %513 = vst [vmem:[%s2 + $0x50] sm:$0xf] %v449
  %514 = vst [vmem:[%s2 + $0x54] sm:$0xf] %v450
  %515 = vst [vmem:[%s2 + $0x58] sm:$0xf] %v451
  %516 = vst [vmem:[%s2 + $0x5c] sm:$0xf] %v452
  %517 = vst [vmem:[%s2 + $0x60] sm:$0xf] %v453
  %518 = vst [vmem:[%s2 + $0x64] sm:$0xf] %v454
  %519 = vst [vmem:[%s2 + $0x68] sm:$0xf] %v455
  %520 = vst [vmem:[%s2 + $0x6c] sm:$0xf] %v456
  %521 = vst [vmem:[%s2 + $0x70] sm:$0xf] %v457
  %522 = vst [vmem:[%s2 + $0x74] sm:$0xf] %v458
  %523 = vst [vmem:[%s2 + $0x78] sm:$0xf] %v459
  %524 = vst [vmem:[%s2 + $0x7c] sm:$0xf] %v460
  // Predicated region
  $region10: #{controlled_gde_forward.3} parent=0 // pred_check
    _
  $region11: #{controlled_gde_forward.3} parent=0 // pred_check_branch
    %526 = sbr.rel (0) target = $region13
  $region12: #{controlled_gde_forward.3} parent=0 // pred_region
    _
  $region13: #{controlled_gde_forward.3} parent=0 // pred_fallthru
    _
  // Predicated region
  $region14: #{controlled_gde_forward.3} parent=0 // pred_check
    _
  $region15: #{controlled_gde_forward.3} parent=0 // pred_check_branch
    %528 = sbr.rel (0) target = $region17
  $region16: #{controlled_gde_forward.3} parent=0 // pred_region
    _
  $region17: #{controlled_gde_forward.3} parent=0 // pred_fallthru
    _

// kernel: controlled_gde_forward.5
$region0: #{controlled_gde_forward.5}
  #allocation0 [shape = 'u32[]', space=smem, size = 0x4, offset = 0x4, fixed_abs, tag = 'smem constant byte address 0x4 - core index']
  #allocation1 [shape = 'u32[144,128]{1,0:T(1,128)}', space=vmem, size = 0x12000, scoped, tag = 'internal scratch']
  #allocation2 [shape = 'f32[256,128]{1,0:T(8,128)}', space=vmem, size = 0x20000, scoped, tag = 'scratch operand']
  %s0 = inlined_call_operand.vmem [shape: bf16[256,256], index: 0, kind: input, shape index: {}]
  %s1 = inlined_call_operand.vmem [shape: bf16[256,128], index: 1, kind: input, shape index: {}]
  %s2 = inlined_call_operand.vmem [shape: f32[1,128], index: 2, kind: input, shape index: {}]
  %s3 = inlined_call_operand.vmem [shape: f32[256,128], index: 3, kind: output, shape index: {}]
  %s4 = sld [smem:[#allocation0]]
  $region30: #{controlled_gde_forward.5} parent=0
    _
  %s6 = ssub.s32 1, %s4
  %s7 = scalar_select 0, %s6, %s4
  // Predicated region
  $region2: #{controlled_gde_forward.5} parent=0 // pred_check
    _
  $region3: #{controlled_gde_forward.5} parent=0 // pred_check_branch
    %9 = sbr.rel (0) target = $region5
  $region4: #{controlled_gde_forward.5} parent=0 // pred_region
    _
  $region5: #{controlled_gde_forward.5} parent=0 // pred_fallthru
    _
  // Predicated region
  $region6: #{controlled_gde_forward.5} parent=0 // pred_check
    _
  $region7: #{controlled_gde_forward.5} parent=0 // pred_check_branch
    %11 = sbr.rel (0) target = $region9
  $region8: #{controlled_gde_forward.5} parent=0 // pred_region
    _
  $region9: #{controlled_gde_forward.5} parent=0 // pred_fallthru
    _
  // Predicated region
  $region10: #{controlled_gde_forward.5} parent=0 // pred_check
    _
  $region11: #{controlled_gde_forward.5} parent=0 // pred_check_branch
    %13 = sbr.rel (0) target = $region13
  $region12: #{controlled_gde_forward.5} parent=0 // pred_region
    _
  $region13: #{controlled_gde_forward.5} parent=0 // pred_fallthru
    _
  %p15 = scmp.eq.s32.totalorder 0, 0
  // Predicated region
  $region14: #{controlled_gde_forward.5} parent=0 // pred_check
    %p16 = pneg %p15
  $region15: #{controlled_gde_forward.5} parent=0 // pred_check_branch
    %18 = sbr.rel (%p16) target = $region17
  $region16: #{controlled_gde_forward.5} parent=0 // pred_region
    %19 = vst [vmem:[#allocation2] sm:$0xff] 0.0
    %20 = vst [vmem:[#allocation2 + $0x8] sm:$0xff] 0.0
    %21 = vst [vmem:[#allocation2 + $0x10] sm:$0xff] 0.0
    %22 = vst [vmem:[#allocation2 + $0x18] sm:$0xff] 0.0
    %23 = vst [vmem:[#allocation2 + $0x20] sm:$0xff] 0.0
    %24 = vst [vmem:[#allocation2 + $0x28] sm:$0xff] 0.0
    %25 = vst [vmem:[#allocation2 + $0x30] sm:$0xff] 0.0
    %26 = vst [vmem:[#allocation2 + $0x38] sm:$0xff] 0.0
    %27 = vst [vmem:[#allocation2 + $0x40] sm:$0xff] 0.0
    %28 = vst [vmem:[#allocation2 + $0x48] sm:$0xff] 0.0
    %29 = vst [vmem:[#allocation2 + $0x50] sm:$0xff] 0.0
    %30 = vst [vmem:[#allocation2 + $0x58] sm:$0xff] 0.0
    %31 = vst [vmem:[#allocation2 + $0x60] sm:$0xff] 0.0
    %32 = vst [vmem:[#allocation2 + $0x68] sm:$0xff] 0.0
    %33 = vst [vmem:[#allocation2 + $0x70] sm:$0xff] 0.0
    %34 = vst [vmem:[#allocation2 + $0x78] sm:$0xff] 0.0
    %35 = vst [vmem:[#allocation2 + $0x80] sm:$0xff] 0.0
    %36 = vst [vmem:[#allocation2 + $0x88] sm:$0xff] 0.0
    %37 = vst [vmem:[#allocation2 + $0x90] sm:$0xff] 0.0
    %38 = vst [vmem:[#allocation2 + $0x98] sm:$0xff] 0.0
    %39 = vst [vmem:[#allocation2 + $0xa0] sm:$0xff] 0.0
    %40 = vst [vmem:[#allocation2 + $0xa8] sm:$0xff] 0.0
    %41 = vst [vmem:[#allocation2 + $0xb0] sm:$0xff] 0.0
    %42 = vst [vmem:[#allocation2 + $0xb8] sm:$0xff] 0.0
    %43 = vst [vmem:[#allocation2 + $0xc0] sm:$0xff] 0.0
    %44 = vst [vmem:[#allocation2 + $0xc8] sm:$0xff] 0.0
    %45 = vst [vmem:[#allocation2 + $0xd0] sm:$0xff] 0.0
    %46 = vst [vmem:[#allocation2 + $0xd8] sm:$0xff] 0.0
    %47 = vst [vmem:[#allocation2 + $0xe0] sm:$0xff] 0.0
    %48 = vst [vmem:[#allocation2 + $0xe8] sm:$0xff] 0.0
    %49 = vst [vmem:[#allocation2 + $0xf0] sm:$0xff] 0.0
    %50 = vst [vmem:[#allocation2 + $0xf8] sm:$0xff] 0.0
  $region17: #{controlled_gde_forward.5} parent=0 // pred_fallthru
    _
  %v51 = vld [vmem:[#allocation2] sm:$0xff]
  %v52 = vld [vmem:[#allocation2 + $0x8] sm:$0xff]
  %v53 = vld [vmem:[#allocation2 + $0x10] sm:$0xff]
  %v54 = vld [vmem:[#allocation2 + $0x18] sm:$0xff]
  %v55 = vld [vmem:[#allocation2 + $0x20] sm:$0xff]
  %v56 = vld [vmem:[#allocation2 + $0x28] sm:$0xff]
  %v57 = vld [vmem:[#allocation2 + $0x30] sm:$0xff]
  %v58 = vld [vmem:[#allocation2 + $0x38] sm:$0xff]
  %v59 = vld [vmem:[#allocation2 + $0x40] sm:$0xff]
  %v60 = vld [vmem:[#allocation2 + $0x48] sm:$0xff]
  %v61 = vld [vmem:[#allocation2 + $0x50] sm:$0xff]
  %v62 = vld [vmem:[#allocation2 + $0x58] sm:$0xff]
  %v63 = vld [vmem:[#allocation2 + $0x60] sm:$0xff]
  %v64 = vld [vmem:[#allocation2 + $0x68] sm:$0xff]
  %v65 = vld [vmem:[#allocation2 + $0x70] sm:$0xff]
  %v66 = vld [vmem:[#allocation2 + $0x78] sm:$0xff]
  %v67 = vld [vmem:[#allocation2 + $0x80] sm:$0xff]
  %v68 = vld [vmem:[#allocation2 + $0x88] sm:$0xff]
  %v69 = vld [vmem:[#allocation2 + $0x90] sm:$0xff]
  %v70 = vld [vmem:[#allocation2 + $0x98] sm:$0xff]
  %v71 = vld [vmem:[#allocation2 + $0xa0] sm:$0xff]
  %v72 = vld [vmem:[#allocation2 + $0xa8] sm:$0xff]
  %v73 = vld [vmem:[#allocation2 + $0xb0] sm:$0xff]
  %v74 = vld [vmem:[#allocation2 + $0xb8] sm:$0xff]
  %v75 = vld [vmem:[#allocation2 + $0xc0] sm:$0xff]
  %v76 = vld [vmem:[#allocation2 + $0xc8] sm:$0xff]
  %v77 = vld [vmem:[#allocation2 + $0xd0] sm:$0xff]
  %v78 = vld [vmem:[#allocation2 + $0xd8] sm:$0xff]
  %v79 = vld [vmem:[#allocation2 + $0xe0] sm:$0xff]
  %v80 = vld [vmem:[#allocation2 + $0xe8] sm:$0xff]
  %v81 = vld [vmem:[#allocation2 + $0xf0] sm:$0xff]
  %v82 = vld [vmem:[#allocation2 + $0xf8] sm:$0xff]
  %v83 = vld [vmem:[%s0] sm:$0xff]
  %v84 = vld [vmem:[%s0 + $0x8] sm:$0xff]
  %v85 = vld [vmem:[%s0 + $0x10] sm:$0xff]
  %v86 = vld [vmem:[%s0 + $0x18] sm:$0xff]
  %v87 = vld [vmem:[%s0 + $0x20] sm:$0xff]
  %v88 = vld [vmem:[%s0 + $0x28] sm:$0xff]
  %v89 = vld [vmem:[%s0 + $0x30] sm:$0xff]
  %v90 = vld [vmem:[%s0 + $0x38] sm:$0xff]
  %v91 = vld [vmem:[%s0 + $0x40] sm:$0xff]
  %v92 = vld [vmem:[%s0 + $0x48] sm:$0xff]
  %v93 = vld [vmem:[%s0 + $0x50] sm:$0xff]
  %v94 = vld [vmem:[%s0 + $0x58] sm:$0xff]
  %v95 = vld [vmem:[%s0 + $0x60] sm:$0xff]
  %v96 = vld [vmem:[%s0 + $0x68] sm:$0xff]
  %v97 = vld [vmem:[%s0 + $0x70] sm:$0xff]
  %v98 = vld [vmem:[%s0 + $0x78] sm:$0xff]
  %v99 = vld [vmem:[%s0 + $0x80] sm:$0xff]
  %v100 = vld [vmem:[%s0 + $0x88] sm:$0xff]
  %v101 = vld [vmem:[%s0 + $0x90] sm:$0xff]
  %v102 = vld [vmem:[%s0 + $0x98] sm:$0xff]
  %v103 = vld [vmem:[%s0 + $0xa0] sm:$0xff]
  %v104 = vld [vmem:[%s0 + $0xa8] sm:$0xff]
  %v105 = vld [vmem:[%s0 + $0xb0] sm:$0xff]
  %v106 = vld [vmem:[%s0 + $0xb8] sm:$0xff]
  %v107 = vld [vmem:[%s0 + $0xc0] sm:$0xff]
  %v108 = vld [vmem:[%s0 + $0xc8] sm:$0xff]
  %v109 = vld [vmem:[%s0 + $0xd0] sm:$0xff]
  %v110 = vld [vmem:[%s0 + $0xd8] sm:$0xff]
  %v111 = vld [vmem:[%s0 + $0xe0] sm:$0xff]
  %v112 = vld [vmem:[%s0 + $0xe8] sm:$0xff]
  %v113 = vld [vmem:[%s0 + $0xf0] sm:$0xff]
  %v114 = vld [vmem:[%s0 + $0xf8] sm:$0xff]
  %v115 = vld [vmem:[%s1] sm:$0xf]
  %v116 = vld [vmem:[%s1 + $0x4] sm:$0xf]
  %v117 = vld [vmem:[%s1 + $0x8] sm:$0xf]
  %v118 = vld [vmem:[%s1 + $0xc] sm:$0xf]
  %v119 = vld [vmem:[%s1 + $0x10] sm:$0xf]
  %v120 = vld [vmem:[%s1 + $0x14] sm:$0xf]
  %v121 = vld [vmem:[%s1 + $0x18] sm:$0xf]
  %v122 = vld [vmem:[%s1 + $0x1c] sm:$0xf]
  %v123 = vld [vmem:[%s1 + $0x20] sm:$0xf]
  %v124 = vld [vmem:[%s1 + $0x24] sm:$0xf]
  %v125 = vld [vmem:[%s1 + $0x28] sm:$0xf]
  %v126 = vld [vmem:[%s1 + $0x2c] sm:$0xf]
  %v127 = vld [vmem:[%s1 + $0x30] sm:$0xf]
  %v128 = vld [vmem:[%s1 + $0x34] sm:$0xf]
  %v129 = vld [vmem:[%s1 + $0x38] sm:$0xf]
  %v130 = vld [vmem:[%s1 + $0x3c] sm:$0xf]
  %v131 = vld [vmem:[%s1 + $0x40] sm:$0xf]
  %v132 = vld [vmem:[%s1 + $0x44] sm:$0xf]
  %v133 = vld [vmem:[%s1 + $0x48] sm:$0xf]
  %v134 = vld [vmem:[%s1 + $0x4c] sm:$0xf]
  %v135 = vld [vmem:[%s1 + $0x50] sm:$0xf]
  %v136 = vld [vmem:[%s1 + $0x54] sm:$0xf]
  %v137 = vld [vmem:[%s1 + $0x58] sm:$0xf]
  %v138 = vld [vmem:[%s1 + $0x5c] sm:$0xf]
  %v139 = vld [vmem:[%s1 + $0x60] sm:$0xf]
  %v140 = vld [vmem:[%s1 + $0x64] sm:$0xf]
  %v141 = vld [vmem:[%s1 + $0x68] sm:$0xf]
  %v142 = vld [vmem:[%s1 + $0x6c] sm:$0xf]
  %v143 = vld [vmem:[%s1 + $0x70] sm:$0xf]
  %v144 = vld [vmem:[%s1 + $0x74] sm:$0xf]
  %v145 = vld [vmem:[%s1 + $0x78] sm:$0xf]
  %v146 = vld [vmem:[%s1 + $0x7c] sm:$0xf]
  %v179 = vunpack.c.l.b16 %v83
  %v180 = vunpack.c.h.b16 %v83
  %v181 = vunpack.c.l.b16 %v84
  %v182 = vunpack.c.h.b16 %v84
  %v183 = vunpack.c.l.b16 %v85
  %v184 = vunpack.c.h.b16 %v85
  %v185 = vunpack.c.l.b16 %v86
  %v186 = vunpack.c.h.b16 %v86
  %v187 = vunpack.c.l.b16 %v87
  %v188 = vunpack.c.h.b16 %v87
  %v189 = vunpack.c.l.b16 %v88
  %v190 = vunpack.c.h.b16 %v88
  %v191 = vunpack.c.l.b16 %v89
  %v192 = vunpack.c.h.b16 %v89
  %v193 = vunpack.c.l.b16 %v90
  %v194 = vunpack.c.h.b16 %v90
  %v195 = vunpack.c.l.b16 %v91
  %v196 = vunpack.c.h.b16 %v91
  %v197 = vunpack.c.l.b16 %v92
  %v198 = vunpack.c.h.b16 %v92
  %v199 = vunpack.c.l.b16 %v93
  %v200 = vunpack.c.h.b16 %v93
  %v201 = vunpack.c.l.b16 %v94
  %v202 = vunpack.c.h.b16 %v94
  %v203 = vunpack.c.l.b16 %v95
  %v204 = vunpack.c.h.b16 %v95
  %v205 = vunpack.c.l.b16 %v96
  %v206 = vunpack.c.h.b16 %v96
  %v207 = vunpack.c.l.b16 %v97
  %v208 = vunpack.c.h.b16 %v97
  %v209 = vunpack.c.l.b16 %v98
  %v210 = vunpack.c.h.b16 %v98
  %v211 = vunpack.c.l.b16 %v99
  %v212 = vunpack.c.h.b16 %v99
  %v213 = vunpack.c.l.b16 %v100
  %v214 = vunpack.c.h.b16 %v100
  %v215 = vunpack.c.l.b16 %v101
  %v216 = vunpack.c.h.b16 %v101
  %v217 = vunpack.c.l.b16 %v102
  %v218 = vunpack.c.h.b16 %v102
  %v219 = vunpack.c.l.b16 %v103
  %v220 = vunpack.c.h.b16 %v103
  %v221 = vunpack.c.l.b16 %v104
  %v222 = vunpack.c.h.b16 %v104
  %v223 = vunpack.c.l.b16 %v105
  %v224 = vunpack.c.h.b16 %v105
  %v225 = vunpack.c.l.b16 %v106
  %v226 = vunpack.c.h.b16 %v106
  %v227 = vunpack.c.l.b16 %v107
  %v228 = vunpack.c.h.b16 %v107
  %v229 = vunpack.c.l.b16 %v108
  %v230 = vunpack.c.h.b16 %v108
  %v231 = vunpack.c.l.b16 %v109
  %v232 = vunpack.c.h.b16 %v109
  %v233 = vunpack.c.l.b16 %v110
  %v234 = vunpack.c.h.b16 %v110
  %v235 = vunpack.c.l.b16 %v111
  %v236 = vunpack.c.h.b16 %v111
  %v237 = vunpack.c.l.b16 %v112
  %v238 = vunpack.c.h.b16 %v112
  %v239 = vunpack.c.l.b16 %v113
  %v240 = vunpack.c.h.b16 %v113
  %v241 = vunpack.c.l.b16 %v114
  %v242 = vunpack.c.h.b16 %v114
  %v243 = vpack.c.b16 %v181, %v179
  %v244 = vpack.c.b16 %v182, %v180
  %v245 = vpack.c.b16 %v185, %v183
  %v246 = vpack.c.b16 %v186, %v184
  %v247 = vpack.c.b16 %v189, %v187
  %v248 = vpack.c.b16 %v190, %v188
  %v249 = vpack.c.b16 %v193, %v191
  %v250 = vpack.c.b16 %v194, %v192
  %v251 = vpack.c.b16 %v197, %v195
  %v252 = vpack.c.b16 %v198, %v196
  %v253 = vpack.c.b16 %v201, %v199
  %v254 = vpack.c.b16 %v202, %v200
  %v255 = vpack.c.b16 %v205, %v203
  %v256 = vpack.c.b16 %v206, %v204
  %v257 = vpack.c.b16 %v209, %v207
  %v258 = vpack.c.b16 %v210, %v208
  %v259 = vpack.c.b16 %v213, %v211
  %v260 = vpack.c.b16 %v214, %v212
  %v261 = vpack.c.b16 %v217, %v215
  %v262 = vpack.c.b16 %v218, %v216
  %v263 = vpack.c.b16 %v221, %v219
  %v264 = vpack.c.b16 %v222, %v220
  %v265 = vpack.c.b16 %v225, %v223
  %v266 = vpack.c.b16 %v226, %v224
  %v267 = vpack.c.b16 %v229, %v227
  %v268 = vpack.c.b16 %v230, %v228
  %v269 = vpack.c.b16 %v233, %v231
  %v270 = vpack.c.b16 %v234, %v232
  %v271 = vpack.c.b16 %v237, %v235
  %v272 = vpack.c.b16 %v238, %v236
  %v273 = vpack.c.b16 %v241, %v239
  %v274 = vpack.c.b16 %v242, %v240
  %v339 = vunpack.c.l.b16 %v115
  %v340 = vunpack.c.l.b16 %v116
  %v341 = vunpack.c.l.b16 %v117
  %v342 = vunpack.c.l.b16 %v118
  %v343 = vunpack.c.l.b16 %v119
  %v344 = vunpack.c.l.b16 %v120
  %v345 = vunpack.c.l.b16 %v121
  %v346 = vunpack.c.l.b16 %v122
  %v347 = vunpack.c.l.b16 %v123
  %v348 = vunpack.c.l.b16 %v124
  %v349 = vunpack.c.l.b16 %v125
  %v350 = vunpack.c.l.b16 %v126
  %v351 = vunpack.c.l.b16 %v127
  %v352 = vunpack.c.l.b16 %v128
  %v353 = vunpack.c.l.b16 %v129
  %v354 = vunpack.c.l.b16 %v130
  %v355 = vunpack.c.l.b16 %v131
  %v356 = vunpack.c.l.b16 %v132
  %v357 = vunpack.c.l.b16 %v133
  %v358 = vunpack.c.l.b16 %v134
  %v359 = vunpack.c.l.b16 %v135
  %v360 = vunpack.c.l.b16 %v136
  %v361 = vunpack.c.l.b16 %v137
  %v362 = vunpack.c.l.b16 %v138
  %v363 = vunpack.c.l.b16 %v139
  %v364 = vunpack.c.l.b16 %v140
  %v365 = vunpack.c.l.b16 %v141
  %v366 = vunpack.c.l.b16 %v142
  %v367 = vunpack.c.l.b16 %v143
  %v368 = vunpack.c.l.b16 %v144
  %v369 = vunpack.c.l.b16 %v145
  %v370 = vunpack.c.l.b16 %v146
  %v371 = vpack.c.b16 %v340, %v339
  %v372 = vpack.c.b16 %v342, %v341
  %v373 = vpack.c.b16 %v344, %v343
  %v374 = vpack.c.b16 %v346, %v345
  %v375 = vpack.c.b16 %v348, %v347
  %v376 = vpack.c.b16 %v350, %v349
  %v377 = vpack.c.b16 %v352, %v351
  %v378 = vpack.c.b16 %v354, %v353
  %v379 = vpack.c.b16 %v356, %v355
  %v380 = vpack.c.b16 %v358, %v357
  %v381 = vpack.c.b16 %v360, %v359
  %v382 = vpack.c.b16 %v362, %v361
  %v383 = vpack.c.b16 %v364, %v363
  %v384 = vpack.c.b16 %v366, %v365
  %v385 = vpack.c.b16 %v368, %v367
  %v386 = vpack.c.b16 %v370, %v369
  %403 = vmatprep.subr.bf16.mxu0 0
  %404 = vmatpush1.bf16.msra.mxu0 %v371
  %405 = vmatprep.subr.bf16.mxu0 0
  %406 = vmatpush1.bf16.msra.mxu0 %v372
  %407 = vmatprep.subr.bf16.mxu0 0
  %408 = vmatpush1.bf16.msra.mxu0 %v373
  %409 = vmatprep.subr.bf16.mxu0 0
  %410 = vmatpush1.bf16.msra.mxu0 %v374
  %411 = vmatprep.subr.bf16.mxu0 0
  %412 = vmatpush1.bf16.msra.mxu0 %v375
  %413 = vmatprep.subr.bf16.mxu0 0
  %414 = vmatpush1.bf16.msra.mxu0 %v376
  %415 = vmatprep.subr.bf16.mxu0 0
  %416 = vmatpush1.bf16.msra.mxu0 %v377
  %417 = vmatprep.subr.bf16.mxu0 0
  %418 = vmatpush1.bf16.msra.mxu0 %v378
  %419 = vmatprep.subr.bf16.mxu0 0
  %420 = vmatpush1.bf16.msra.mxu0 %v379
  %421 = vmatprep.subr.bf16.mxu0 0
  %422 = vmatpush1.bf16.msra.mxu0 %v380
  %423 = vmatprep.subr.bf16.mxu0 0
  %424 = vmatpush1.bf16.msra.mxu0 %v381
  %425 = vmatprep.subr.bf16.mxu0 0
  %426 = vmatpush1.bf16.msra.mxu0 %v382
  %427 = vmatprep.subr.bf16.mxu0 0
  %428 = vmatpush1.bf16.msra.mxu0 %v383
  %429 = vmatprep.subr.bf16.mxu0 0
  %430 = vmatpush1.bf16.msra.mxu0 %v384
  %431 = vmatprep.subr.bf16.mxu0 0
  %432 = vmatpush1.bf16.msra.mxu0 %v385
  %433 = vmatprep.subr.bf16.mxu0 0
  %434 = vmatpush1.bf16.msra.mxu0 %v386
  %435 = vmatprep.mubr.bf16.mxu0 %v244
  %436 = vmatmul.mubr.bf16.gmra.mrb[0].mxu0 %v243
  %v437 = vpop.f32.mrb[0].mxu0
  %v438 = vadd.f32 0.0, %v437
  %v439 = vpop.f32.mrb[0].mxu0
  %v440 = vpop.f32.mrb[0].mxu0
  %v441 = vadd.f32 0.0, %v440
  %v442 = vpop.f32.mrb[0].mxu0
  %443 = vmatprep.mubr.bf16.mxu0 %v246
  %444 = vmatmul.mubr.bf16.gmra.mrb[0].mxu0 %v245
  %v445 = vpop.f32.mrb[0].mxu0
  %v446 = vadd.f32 0.0, %v445
  %v447 = vpop.f32.mrb[0].mxu0
  %v448 = vpop.f32.mrb[0].mxu0
  %v449 = vadd.f32 0.0, %v448
  %v450 = vpop.f32.mrb[0].mxu0
  %451 = vmatprep.mubr.bf16.mxu0 %v248
  %452 = vmatmul.mubr.bf16.gmra.mrb[0].mxu0 %v247
  %v453 = vpop.f32.mrb[0].mxu0
  %v454 = vadd.f32 0.0, %v453
  %v455 = vpop.f32.mrb[0].mxu0
  %v456 = vpop.f32.mrb[0].mxu0
  %v457 = vadd.f32 0.0, %v456
  %v458 = vpop.f32.mrb[0].mxu0
  %459 = vmatprep.mubr.bf16.mxu0 %v250
  %460 = vmatmul.mubr.bf16.gmra.mrb[0].mxu0 %v249
  %v461 = vpop.f32.mrb[0].mxu0
  %v462 = vadd.f32 0.0, %v461
  %v463 = vpop.f32.mrb[0].mxu0
  %v464 = vpop.f32.mrb[0].mxu0
  %v465 = vadd.f32 0.0, %v464
  %v466 = vpop.f32.mrb[0].mxu0
  %467 = vmatprep.mubr.bf16.mxu0 %v252
  %468 = vmatmul.mubr.bf16.gmra.mrb[0].mxu0 %v251
  %v469 = vpop.f32.mrb[0].mxu0
  %v470 = vadd.f32 0.0, %v469
  %v471 = vpop.f32.mrb[0].mxu0
  %v472 = vpop.f32.mrb[0].mxu0
  %v473 = vadd.f32 0.0, %v472
  %v474 = vpop.f32.mrb[0].mxu0
  %475 = vmatprep.mubr.bf16.mxu0 %v254
  %476 = vmatmul.mubr.bf16.gmra.mrb[0].mxu0 %v253
  %v477 = vpop.f32.mrb[0].mxu0
  %v478 = vadd.f32 0.0, %v477
  %v479 = vpop.f32.mrb[0].mxu0
  %v480 = vpop.f32.mrb[0].mxu0
  %v481 = vadd.f32 0.0, %v480
  %v482 = vpop.f32.mrb[0].mxu0
  %483 = vmatprep.mubr.bf16.mxu0 %v256
  %484 = vmatmul.mubr.bf16.gmra.mrb[0].mxu0 %v255
  %v485 = vpop.f32.mrb[0].mxu0
  %v486 = vadd.f32 0.0, %v485
  %v487 = vpop.f32.mrb[0].mxu0
  %v488 = vpop.f32.mrb[0].mxu0
  %v489 = vadd.f32 0.0, %v488
  %v490 = vpop.f32.mrb[0].mxu0
  %491 = vmatprep.mubr.bf16.mxu0 %v258
  %492 = vmatmul.mubr.bf16.gmra.mrb[0].mxu0 %v257
  %v493 = vpop.f32.mrb[0].mxu0
  %v494 = vadd.f32 0.0, %v493
  %v495 = vpop.f32.mrb[0].mxu0
  %v496 = vpop.f32.mrb[0].mxu0
  %v497 = vadd.f32 0.0, %v496
  %v498 = vpop.f32.mrb[0].mxu0
  %499 = vmatprep.mubr.bf16.mxu0 %v260
  %500 = vmatmul.mubr.bf16.gmra.mrb[0].mxu0 %v259
  %v501 = vpop.f32.mrb[0].mxu0
  %v502 = vadd.f32 0.0, %v501
  %v503 = vpop.f32.mrb[0].mxu0
  %v504 = vpop.f32.mrb[0].mxu0
  %v505 = vadd.f32 0.0, %v504
  %v506 = vpop.f32.mrb[0].mxu0
  %507 = vmatprep.mubr.bf16.mxu0 %v262
  %508 = vmatmul.mubr.bf16.gmra.mrb[0].mxu0 %v261
  %v509 = vpop.f32.mrb[0].mxu0
  %v510 = vadd.f32 0.0, %v509
  %v511 = vpop.f32.mrb[0].mxu0
  %v512 = vpop.f32.mrb[0].mxu0
  %v513 = vadd.f32 0.0, %v512
  %v514 = vpop.f32.mrb[0].mxu0
  %515 = vmatprep.mubr.bf16.mxu0 %v264
  %516 = vmatmul.mubr.bf16.gmra.mrb[0].mxu0 %v263
  %v517 = vpop.f32.mrb[0].mxu0
  %v518 = vadd.f32 0.0, %v517
  %v519 = vpop.f32.mrb[0].mxu0
  %v520 = vpop.f32.mrb[0].mxu0
  %v521 = vadd.f32 0.0, %v520
  %v522 = vpop.f32.mrb[0].mxu0
  %523 = vmatprep.mubr.bf16.mxu0 %v266
  %524 = vmatmul.mubr.bf16.gmra.mrb[0].mxu0 %v265
  %v525 = vpop.f32.mrb[0].mxu0
  %v526 = vadd.f32 0.0, %v525
  %v527 = vpop.f32.mrb[0].mxu0
  %v528 = vpop.f32.mrb[0].mxu0
  %v529 = vadd.f32 0.0, %v528
  %v530 = vpop.f32.mrb[0].mxu0
  %531 = vmatprep.mubr.bf16.mxu0 %v268
  %532 = vmatmul.mubr.bf16.gmra.mrb[0].mxu0 %v267
  %v533 = vpop.f32.mrb[0].mxu0
  %v534 = vadd.f32 0.0, %v533
  %v535 = vpop.f32.mrb[0].mxu0
  %v536 = vpop.f32.mrb[0].mxu0
  %v537 = vadd.f32 0.0, %v536
  %v538 = vpop.f32.mrb[0].mxu0
  %539 = vmatprep.mubr.bf16.mxu0 %v270
  %540 = vmatmul.mubr.bf16.gmra.mrb[0].mxu0 %v269
  %v541 = vpop.f32.mrb[0].mxu0
  %v542 = vadd.f32 0.0, %v541
  %v543 = vpop.f32.mrb[0].mxu0
  %v544 = vpop.f32.mrb[0].mxu0
  %v545 = vadd.f32 0.0, %v544
  %v546 = vpop.f32.mrb[0].mxu0
  %547 = vmatprep.mubr.bf16.mxu0 %v272
  %548 = vmatmul.mubr.bf16.gmra.mrb[0].mxu0 %v271
  %v549 = vpop.f32.mrb[0].mxu0
  %v550 = vadd.f32 0.0, %v549
  %v551 = vpop.f32.mrb[0].mxu0
  %v552 = vpop.f32.mrb[0].mxu0
  %v553 = vadd.f32 0.0, %v552
  %v554 = vpop.f32.mrb[0].mxu0
  %555 = vmatprep.mubr.bf16.mxu0 %v274
  %556 = vmatmul.mubr.bf16.gmra.mrb[0].mxu0 %v273
  %v557 = vpop.f32.mrb[0].mxu0
  %v558 = vadd.f32 0.0, %v557
  %v559 = vpop.f32.mrb[0].mxu0
  %v560 = vpop.f32.mrb[0].mxu0
  %v561 = vadd.f32 0.0, %v560
  %v562 = vpop.f32.mrb[0].mxu0
  %563 = vdwg.mxu0
  %v564 = vadd.f32 %v51, %v438
  %v565 = vadd.f32 %v52, %v441
  %v566 = vadd.f32 %v53, %v446
  %v567 = vadd.f32 %v54, %v449
  %v568 = vadd.f32 %v55, %v454
  %v569 = vadd.f32 %v56, %v457
  %v570 = vadd.f32 %v57, %v462
  %v571 = vadd.f32 %v58, %v465
  %v572 = vadd.f32 %v59, %v470
  %v573 = vadd.f32 %v60, %v473
  %v574 = vadd.f32 %v61, %v478
  %v575 = vadd.f32 %v62, %v481
  %v576 = vadd.f32 %v63, %v486
  %v577 = vadd.f32 %v64, %v489
  %v578 = vadd.f32 %v65, %v494
  %v579 = vadd.f32 %v66, %v497
  %v580 = vadd.f32 %v67, %v502
  %v581 = vadd.f32 %v68, %v505
  %v582 = vadd.f32 %v69, %v510
  %v583 = vadd.f32 %v70, %v513
  %v584 = vadd.f32 %v71, %v518
  %v585 = vadd.f32 %v72, %v521
  %v586 = vadd.f32 %v73, %v526
  %v587 = vadd.f32 %v74, %v529
  %v588 = vadd.f32 %v75, %v534
  %v589 = vadd.f32 %v76, %v537
  %v590 = vadd.f32 %v77, %v542
  %v591 = vadd.f32 %v78, %v545
  %v592 = vadd.f32 %v79, %v550
  %v593 = vadd.f32 %v80, %v553
  %v594 = vadd.f32 %v81, %v558
  %v595 = vadd.f32 %v82, %v561
  %596 = vst [vmem:[#allocation2] sm:$0xff] %v564
  %597 = vst [vmem:[#allocation2 + $0x8] sm:$0xff] %v565
  %598 = vst [vmem:[#allocation2 + $0x10] sm:$0xff] %v566
  %599 = vst [vmem:[#allocation2 + $0x18] sm:$0xff] %v567
  %600 = vst [vmem:[#allocation2 + $0x20] sm:$0xff] %v568
  %601 = vst [vmem:[#allocation2 + $0x28] sm:$0xff] %v569
  %602 = vst [vmem:[#allocation2 + $0x30] sm:$0xff] %v570
  %603 = vst [vmem:[#allocation2 + $0x38] sm:$0xff] %v571
  %604 = vst [vmem:[#allocation2 + $0x40] sm:$0xff] %v572
  %605 = vst [vmem:[#allocation2 + $0x48] sm:$0xff] %v573
  %606 = vst [vmem:[#allocation2 + $0x50] sm:$0xff] %v574
  %607 = vst [vmem:[#allocation2 + $0x58] sm:$0xff] %v575
  %608 = vst [vmem:[#allocation2 + $0x60] sm:$0xff] %v576
  %609 = vst [vmem:[#allocation2 + $0x68] sm:$0xff] %v577
  %610 = vst [vmem:[#allocation2 + $0x70] sm:$0xff] %v578
  %611 = vst [vmem:[#allocation2 + $0x78] sm:$0xff] %v579
  %612 = vst [vmem:[#allocation2 + $0x80] sm:$0xff] %v580
  %613 = vst [vmem:[#allocation2 + $0x88] sm:$0xff] %v581
  %614 = vst [vmem:[#allocation2 + $0x90] sm:$0xff] %v582
  %615 = vst [vmem:[#allocation2 + $0x98] sm:$0xff] %v583
  %616 = vst [vmem:[#allocation2 + $0xa0] sm:$0xff] %v584
  %617 = vst [vmem:[#allocation2 + $0xa8] sm:$0xff] %v585
  %618 = vst [vmem:[#allocation2 + $0xb0] sm:$0xff] %v586
  %619 = vst [vmem:[#allocation2 + $0xb8] sm:$0xff] %v587
  %620 = vst [vmem:[#allocation2 + $0xc0] sm:$0xff] %v588
  %621 = vst [vmem:[#allocation2 + $0xc8] sm:$0xff] %v589
  %622 = vst [vmem:[#allocation2 + $0xd0] sm:$0xff] %v590
  %623 = vst [vmem:[#allocation2 + $0xd8] sm:$0xff] %v591
  %624 = vst [vmem:[#allocation2 + $0xe0] sm:$0xff] %v592
  %625 = vst [vmem:[#allocation2 + $0xe8] sm:$0xff] %v593
  %626 = vst [vmem:[#allocation2 + $0xf0] sm:$0xff] %v594
  %627 = vst [vmem:[#allocation2 + $0xf8] sm:$0xff] %v595
  // Predicated region
  $region18: #{controlled_gde_forward.5} parent=0 // pred_check
    %p628 = pneg %p15
  $region19: #{controlled_gde_forward.5} parent=0 // pred_check_branch
    %630 = sbr.rel (%p628) target = $region21
  $region20: #{controlled_gde_forward.5} parent=0 // pred_region
    %v631 = vld [vmem:[#allocation2] sm:$0xff]
    %v632 = vld [vmem:[#allocation2 + $0x8] sm:$0xff]
    %v633 = vld [vmem:[#allocation2 + $0x10] sm:$0xff]
    %v634 = vld [vmem:[#allocation2 + $0x18] sm:$0xff]
    %v635 = vld [vmem:[#allocation2 + $0x20] sm:$0xff]
    %v636 = vld [vmem:[#allocation2 + $0x28] sm:$0xff]
    %v637 = vld [vmem:[#allocation2 + $0x30] sm:$0xff]
    %v638 = vld [vmem:[#allocation2 + $0x38] sm:$0xff]
    %v639 = vld [vmem:[#allocation2 + $0x40] sm:$0xff]
    %v640 = vld [vmem:[#allocation2 + $0x48] sm:$0xff]
    %v641 = vld [vmem:[#allocation2 + $0x50] sm:$0xff]
    %v642 = vld [vmem:[#allocation2 + $0x58] sm:$0xff]
    %v643 = vld [vmem:[#allocation2 + $0x60] sm:$0xff]
    %v644 = vld [vmem:[#allocation2 + $0x68] sm:$0xff]
    %v645 = vld [vmem:[#allocation2 + $0x70] sm:$0xff]
    %v646 = vld [vmem:[#allocation2 + $0x78] sm:$0xff]
    %v647 = vld [vmem:[#allocation2 + $0x80] sm:$0xff]
    %v648 = vld [vmem:[#allocation2 + $0x88] sm:$0xff]
    %v649 = vld [vmem:[#allocation2 + $0x90] sm:$0xff]
    %v650 = vld [vmem:[#allocation2 + $0x98] sm:$0xff]
    %v651 = vld [vmem:[#allocation2 + $0xa0] sm:$0xff]
    %v652 = vld [vmem:[#allocation2 + $0xa8] sm:$0xff]
    %v653 = vld [vmem:[#allocation2 + $0xb0] sm:$0xff]
    %v654 = vld [vmem:[#allocation2 + $0xb8] sm:$0xff]
    %v655 = vld [vmem:[#allocation2 + $0xc0] sm:$0xff]
    %v656 = vld [vmem:[#allocation2 + $0xc8] sm:$0xff]
    %v657 = vld [vmem:[#allocation2 + $0xd0] sm:$0xff]
    %v658 = vld [vmem:[#allocation2 + $0xd8] sm:$0xff]
    %v659 = vld [vmem:[#allocation2 + $0xe0] sm:$0xff]
    %v660 = vld [vmem:[#allocation2 + $0xe8] sm:$0xff]
    %v661 = vld [vmem:[#allocation2 + $0xf0] sm:$0xff]
    %v662 = vld [vmem:[#allocation2 + $0xf8] sm:$0xff]
    %v663 = vld [vmem:[%s2] sm:$0x1]
    %v665 = vlaneseq
    %v666 = vshrl.u32 %v665, 7
    %v667 = vsub.s32 0, %v666
    %v668 = vrot.slane %v663, %v667
    %v670 = vadd.f32 %v631, %v668
    %v671 = vadd.f32 %v632, %v668
    %v672 = vadd.f32 %v633, %v668
    %v673 = vadd.f32 %v634, %v668
    %v674 = vadd.f32 %v635, %v668
    %v675 = vadd.f32 %v636, %v668
    %v676 = vadd.f32 %v637, %v668
    %v677 = vadd.f32 %v638, %v668
    %v678 = vadd.f32 %v639, %v668
    %v679 = vadd.f32 %v640, %v668
    %v680 = vadd.f32 %v641, %v668
    %v681 = vadd.f32 %v642, %v668
    %v682 = vadd.f32 %v643, %v668
    %v683 = vadd.f32 %v644, %v668
    %v684 = vadd.f32 %v645, %v668
    %v685 = vadd.f32 %v646, %v668
    %v686 = vadd.f32 %v647, %v668
    %v687 = vadd.f32 %v648, %v668
    %v688 = vadd.f32 %v649, %v668
    %v689 = vadd.f32 %v650, %v668
    %v690 = vadd.f32 %v651, %v668
    %v691 = vadd.f32 %v652, %v668
    %v692 = vadd.f32 %v653, %v668
    %v693 = vadd.f32 %v654, %v668
    %v694 = vadd.f32 %v655, %v668
    %v695 = vadd.f32 %v656, %v668
    %v696 = vadd.f32 %v657, %v668
    %v697 = vadd.f32 %v658, %v668
    %v698 = vadd.f32 %v659, %v668
    %v699 = vadd.f32 %v660, %v668
    %v700 = vadd.f32 %v661, %v668
    %v701 = vadd.f32 %v662, %v668
    %702 = vst [vmem:[%s3] sm:$0xff] %v670
    %703 = vst [vmem:[%s3 + $0x8] sm:$0xff] %v671
    %704 = vst [vmem:[%s3 + $0x10] sm:$0xff] %v672
    %705 = vst [vmem:[%s3 + $0x18] sm:$0xff] %v673
    %706 = vst [vmem:[%s3 + $0x20] sm:$0xff] %v674
    %707 = vst [vmem:[%s3 + $0x28] sm:$0xff] %v675
    %708 = vst [vmem:[%s3 + $0x30] sm:$0xff] %v676
    %709 = vst [vmem:[%s3 + $0x38] sm:$0xff] %v677
    %710 = vst [vmem:[%s3 + $0x40] sm:$0xff] %v678
    %711 = vst [vmem:[%s3 + $0x48] sm:$0xff] %v679
    %712 = vst [vmem:[%s3 + $0x50] sm:$0xff] %v680
    %713 = vst [vmem:[%s3 + $0x58] sm:$0xff] %v681
    %714 = vst [vmem:[%s3 + $0x60] sm:$0xff] %v682
    %715 = vst [vmem:[%s3 + $0x68] sm:$0xff] %v683
    %716 = vst [vmem:[%s3 + $0x70] sm:$0xff] %v684
    %717 = vst [vmem:[%s3 + $0x78] sm:$0xff] %v685
    %718 = vst [vmem:[%s3 + $0x80] sm:$0xff] %v686
    %719 = vst [vmem:[%s3 + $0x88] sm:$0xff] %v687
    %720 = vst [vmem:[%s3 + $0x90] sm:$0xff] %v688
    %721 = vst [vmem:[%s3 + $0x98] sm:$0xff] %v689
    %722 = vst [vmem:[%s3 + $0xa0] sm:$0xff] %v690
    %723 = vst [vmem:[%s3 + $0xa8] sm:$0xff] %v691
    %724 = vst [vmem:[%s3 + $0xb0] sm:$0xff] %v692
    %725 = vst [vmem:[%s3 + $0xb8] sm:$0xff] %v693
    %726 = vst [vmem:[%s3 + $0xc0] sm:$0xff] %v694
    %727 = vst [vmem:[%s3 + $0xc8] sm:$0xff] %v695
    %728 = vst [vmem:[%s3 + $0xd0] sm:$0xff] %v696
    %729 = vst [vmem:[%s3 + $0xd8] sm:$0xff] %v697
    %730 = vst [vmem:[%s3 + $0xe0] sm:$0xff] %v698
    %731 = vst [vmem:[%s3 + $0xe8] sm:$0xff] %v699
    %732 = vst [vmem:[%s3 + $0xf0] sm:$0xff] %v700
    %733 = vst [vmem:[%s3 + $0xf8] sm:$0xff] %v701
  $region21: #{controlled_gde_forward.5} parent=0 // pred_fallthru
    _
  // Predicated region
  $region22: #{controlled_gde_forward.5} parent=0 // pred_check
    _
  $region23: #{controlled_gde_forward.5} parent=0 // pred_check_branch
    %735 = sbr.rel (0) target = $region25
  $region24: #{controlled_gde_forward.5} parent=0 // pred_region
    _
  $region25: #{controlled_gde_forward.5} parent=0 // pred_fallthru
    _
  // Predicated region
  $region26: #{controlled_gde_forward.5} parent=0 // pred_check
    _
  $region27: #{controlled_gde_forward.5} parent=0 // pred_check_branch
    %737 = sbr.rel (0) target = $region29
  $region28: #{controlled_gde_forward.5} parent=0 // pred_region
    _
  $region29: #{controlled_gde_forward.5} parent=0 // pred_fallthru
    _

// kernel: controlled_gde_forward.4
$region0: #{controlled_gde_forward.4}
  #allocation0 [shape = 'u32[]', space=smem, size = 0x4, offset = 0x4, fixed_abs, tag = 'smem constant byte address 0x4 - core index']
  #allocation1 [shape = 'u32[144,128]{1,0:T(1,128)}', space=vmem, size = 0x12000, scoped, tag = 'internal scratch']
  #allocation2 [shape = 'f32[256,128]{1,0:T(8,128)}', space=vmem, size = 0x20000, scoped, tag = 'scratch operand']
  %s0 = inlined_call_operand.vmem [shape: bf16[256,256], index: 0, kind: input, shape index: {}]
  %s1 = inlined_call_operand.vmem [shape: bf16[256,128], index: 1, kind: input, shape index: {}]
  %s2 = inlined_call_operand.vmem [shape: f32[1,128], index: 2, kind: input, shape index: {}]
  %s3 = inlined_call_operand.vmem [shape: bf16[128,128], index: 3, kind: input, shape index: {}]
  %s4 = inlined_call_operand.vmem [shape: bf16[256,128], index: 4, kind: output, shape index: {}]
  %s5 = sld [smem:[#allocation0]]
  $region34: #{controlled_gde_forward.4} parent=0
    _
  %s7 = ssub.s32 1, %s5
  %s8 = scalar_select 0, %s7, %s5
  // Predicated region
  $region2: #{controlled_gde_forward.4} parent=0 // pred_check
    _
  $region3: #{controlled_gde_forward.4} parent=0 // pred_check_branch
    %10 = sbr.rel (0) target = $region5
  $region4: #{controlled_gde_forward.4} parent=0 // pred_region
    _
  $region5: #{controlled_gde_forward.4} parent=0 // pred_fallthru
    _
  // Predicated region
  $region6: #{controlled_gde_forward.4} parent=0 // pred_check
    _
  $region7: #{controlled_gde_forward.4} parent=0 // pred_check_branch
    %12 = sbr.rel (0) target = $region9
  $region8: #{controlled_gde_forward.4} parent=0 // pred_region
    _
  $region9: #{controlled_gde_forward.4} parent=0 // pred_fallthru
    _
  // Predicated region
  $region10: #{controlled_gde_forward.4} parent=0 // pred_check
    _
  $region11: #{controlled_gde_forward.4} parent=0 // pred_check_branch
    %14 = sbr.rel (0) target = $region13
  $region12: #{controlled_gde_forward.4} parent=0 // pred_region
    _
  $region13: #{controlled_gde_forward.4} parent=0 // pred_fallthru
    _
  // Predicated region
  $region14: #{controlled_gde_forward.4} parent=0 // pred_check
    _
  $region15: #{controlled_gde_forward.4} parent=0 // pred_check_branch
    %16 = sbr.rel (0) target = $region17
  $region16: #{controlled_gde_forward.4} parent=0 // pred_region
    _
  $region17: #{controlled_gde_forward.4} parent=0 // pred_fallthru
    _
  %p18 = scmp.eq.s32.totalorder 0, 0
  // Predicated region
  $region18: #{controlled_gde_forward.4} parent=0 // pred_check
    %p19 = pneg %p18
  $region19: #{controlled_gde_forward.4} parent=0 // pred_check_branch
    %21 = sbr.rel (%p19) target = $region21
  $region20: #{controlled_gde_forward.4} parent=0 // pred_region
    %22 = vst [vmem:[#allocation2] sm:$0xff] 0.0
    %23 = vst [vmem:[#allocation2 + $0x8] sm:$0xff] 0.0
    %24 = vst [vmem:[#allocation2 + $0x10] sm:$0xff] 0.0
    %25 = vst [vmem:[#allocation2 + $0x18] sm:$0xff] 0.0
    %26 = vst [vmem:[#allocation2 + $0x20] sm:$0xff] 0.0
    %27 = vst [vmem:[#allocation2 + $0x28] sm:$0xff] 0.0
    %28 = vst [vmem:[#allocation2 + $0x30] sm:$0xff] 0.0
    %29 = vst [vmem:[#allocation2 + $0x38] sm:$0xff] 0.0
    %30 = vst [vmem:[#allocation2 + $0x40] sm:$0xff] 0.0
    %31 = vst [vmem:[#allocation2 + $0x48] sm:$0xff] 0.0
    %32 = vst [vmem:[#allocation2 + $0x50] sm:$0xff] 0.0
    %33 = vst [vmem:[#allocation2 + $0x58] sm:$0xff] 0.0
    %34 = vst [vmem:[#allocation2 + $0x60] sm:$0xff] 0.0
    %35 = vst [vmem:[#allocation2 + $0x68] sm:$0xff] 0.0
    %36 = vst [vmem:[#allocation2 + $0x70] sm:$0xff] 0.0
    %37 = vst [vmem:[#allocation2 + $0x78] sm:$0xff] 0.0
    %38 = vst [vmem:[#allocation2 + $0x80] sm:$0xff] 0.0
    %39 = vst [vmem:[#allocation2 + $0x88] sm:$0xff] 0.0
    %40 = vst [vmem:[#allocation2 + $0x90] sm:$0xff] 0.0
    %41 = vst [vmem:[#allocation2 + $0x98] sm:$0xff] 0.0
    %42 = vst [vmem:[#allocation2 + $0xa0] sm:$0xff] 0.0
    %43 = vst [vmem:[#allocation2 + $0xa8] sm:$0xff] 0.0
    %44 = vst [vmem:[#allocation2 + $0xb0] sm:$0xff] 0.0
    %45 = vst [vmem:[#allocation2 + $0xb8] sm:$0xff] 0.0
    %46 = vst [vmem:[#allocation2 + $0xc0] sm:$0xff] 0.0
    %47 = vst [vmem:[#allocation2 + $0xc8] sm:$0xff] 0.0
    %48 = vst [vmem:[#allocation2 + $0xd0] sm:$0xff] 0.0
    %49 = vst [vmem:[#allocation2 + $0xd8] sm:$0xff] 0.0
    %50 = vst [vmem:[#allocation2 + $0xe0] sm:$0xff] 0.0
    %51 = vst [vmem:[#allocation2 + $0xe8] sm:$0xff] 0.0
    %52 = vst [vmem:[#allocation2 + $0xf0] sm:$0xff] 0.0
    %53 = vst [vmem:[#allocation2 + $0xf8] sm:$0xff] 0.0
  $region21: #{controlled_gde_forward.4} parent=0 // pred_fallthru
    _
  %v54 = vld [vmem:[#allocation2] sm:$0xff]
  %v55 = vld [vmem:[#allocation2 + $0x8] sm:$0xff]
  %v56 = vld [vmem:[#allocation2 + $0x10] sm:$0xff]
  %v57 = vld [vmem:[#allocation2 + $0x18] sm:$0xff]
  %v58 = vld [vmem:[#allocation2 + $0x20] sm:$0xff]
  %v59 = vld [vmem:[#allocation2 + $0x28] sm:$0xff]
  %v60 = vld [vmem:[#allocation2 + $0x30] sm:$0xff]
  %v61 = vld [vmem:[#allocation2 + $0x38] sm:$0xff]
  %v62 = vld [vmem:[#allocation2 + $0x40] sm:$0xff]
  %v63 = vld [vmem:[#allocation2 + $0x48] sm:$0xff]
  %v64 = vld [vmem:[#allocation2 + $0x50] sm:$0xff]
  %v65 = vld [vmem:[#allocation2 + $0x58] sm:$0xff]
  %v66 = vld [vmem:[#allocation2 + $0x60] sm:$0xff]
  %v67 = vld [vmem:[#allocation2 + $0x68] sm:$0xff]
  %v68 = vld [vmem:[#allocation2 + $0x70] sm:$0xff]
  %v69 = vld [vmem:[#allocation2 + $0x78] sm:$0xff]
  %v70 = vld [vmem:[#allocation2 + $0x80] sm:$0xff]
  %v71 = vld [vmem:[#allocation2 + $0x88] sm:$0xff]
  %v72 = vld [vmem:[#allocation2 + $0x90] sm:$0xff]
  %v73 = vld [vmem:[#allocation2 + $0x98] sm:$0xff]
  %v74 = vld [vmem:[#allocation2 + $0xa0] sm:$0xff]
  %v75 = vld [vmem:[#allocation2 + $0xa8] sm:$0xff]
  %v76 = vld [vmem:[#allocation2 + $0xb0] sm:$0xff]
  %v77 = vld [vmem:[#allocation2 + $0xb8] sm:$0xff]
  %v78 = vld [vmem:[#allocation2 + $0xc0] sm:$0xff]
  %v79 = vld [vmem:[#allocation2 + $0xc8] sm:$0xff]
  %v80 = vld [vmem:[#allocation2 + $0xd0] sm:$0xff]
  %v81 = vld [vmem:[#allocation2 + $0xd8] sm:$0xff]
  %v82 = vld [vmem:[#allocation2 + $0xe0] sm:$0xff]
  %v83 = vld [vmem:[#allocation2 + $0xe8] sm:$0xff]
  %v84 = vld [vmem:[#allocation2 + $0xf0] sm:$0xff]
  %v85 = vld [vmem:[#allocation2 + $0xf8] sm:$0xff]
  %v86 = vld [vmem:[%s0] sm:$0xff]
  %v87 = vld [vmem:[%s0 + $0x8] sm:$0xff]
  %v88 = vld [vmem:[%s0 + $0x10] sm:$0xff]
  %v89 = vld [vmem:[%s0 + $0x18] sm:$0xff]
  %v90 = vld [vmem:[%s0 + $0x20] sm:$0xff]
  %v91 = vld [vmem:[%s0 + $0x28] sm:$0xff]
  %v92 = vld [vmem:[%s0 + $0x30] sm:$0xff]
  %v93 = vld [vmem:[%s0 + $0x38] sm:$0xff]
  %v94 = vld [vmem:[%s0 + $0x40] sm:$0xff]
  %v95 = vld [vmem:[%s0 + $0x48] sm:$0xff]
  %v96 = vld [vmem:[%s0 + $0x50] sm:$0xff]
  %v97 = vld [vmem:[%s0 + $0x58] sm:$0xff]
  %v98 = vld [vmem:[%s0 + $0x60] sm:$0xff]
  %v99 = vld [vmem:[%s0 + $0x68] sm:$0xff]
  %v100 = vld [vmem:[%s0 + $0x70] sm:$0xff]
  %v101 = vld [vmem:[%s0 + $0x78] sm:$0xff]
  %v102 = vld [vmem:[%s0 + $0x80] sm:$0xff]
  %v103 = vld [vmem:[%s0 + $0x88] sm:$0xff]
  %v104 = vld [vmem:[%s0 + $0x90] sm:$0xff]
  %v105 = vld [vmem:[%s0 + $0x98] sm:$0xff]
  %v106 = vld [vmem:[%s0 + $0xa0] sm:$0xff]
  %v107 = vld [vmem:[%s0 + $0xa8] sm:$0xff]
  %v108 = vld [vmem:[%s0 + $0xb0] sm:$0xff]
  %v109 = vld [vmem:[%s0 + $0xb8] sm:$0xff]
  %v110 = vld [vmem:[%s0 + $0xc0] sm:$0xff]
  %v111 = vld [vmem:[%s0 + $0xc8] sm:$0xff]
  %v112 = vld [vmem:[%s0 + $0xd0] sm:$0xff]
  %v113 = vld [vmem:[%s0 + $0xd8] sm:$0xff]
  %v114 = vld [vmem:[%s0 + $0xe0] sm:$0xff]
  %v115 = vld [vmem:[%s0 + $0xe8] sm:$0xff]
  %v116 = vld [vmem:[%s0 + $0xf0] sm:$0xff]
  %v117 = vld [vmem:[%s0 + $0xf8] sm:$0xff]
  %v118 = vld [vmem:[%s1] sm:$0xf]
  %v119 = vld [vmem:[%s1 + $0x4] sm:$0xf]
  %v120 = vld [vmem:[%s1 + $0x8] sm:$0xf]
  %v121 = vld [vmem:[%s1 + $0xc] sm:$0xf]
  %v122 = vld [vmem:[%s1 + $0x10] sm:$0xf]
  %v123 = vld [vmem:[%s1 + $0x14] sm:$0xf]
  %v124 = vld [vmem:[%s1 + $0x18] sm:$0xf]
  %v125 = vld [vmem:[%s1 + $0x1c] sm:$0xf]
  %v126 = vld [vmem:[%s1 + $0x20] sm:$0xf]
  %v127 = vld [vmem:[%s1 + $0x24] sm:$0xf]
  %v128 = vld [vmem:[%s1 + $0x28] sm:$0xf]
  %v129 = vld [vmem:[%s1 + $0x2c] sm:$0xf]
  %v130 = vld [vmem:[%s1 + $0x30] sm:$0xf]
  %v131 = vld [vmem:[%s1 + $0x34] sm:$0xf]
  %v132 = vld [vmem:[%s1 + $0x38] sm:$0xf]
  %v133 = vld [vmem:[%s1 + $0x3c] sm:$0xf]
  %v134 = vld [vmem:[%s1 + $0x40] sm:$0xf]
  %v135 = vld [vmem:[%s1 + $0x44] sm:$0xf]
  %v136 = vld [vmem:[%s1 + $0x48] sm:$0xf]
  %v137 = vld [vmem:[%s1 + $0x4c] sm:$0xf]
  %v138 = vld [vmem:[%s1 + $0x50] sm:$0xf]
  %v139 = vld [vmem:[%s1 + $0x54] sm:$0xf]
  %v140 = vld [vmem:[%s1 + $0x58] sm:$0xf]
  %v141 = vld [vmem:[%s1 + $0x5c] sm:$0xf]
  %v142 = vld [vmem:[%s1 + $0x60] sm:$0xf]
  %v143 = vld [vmem:[%s1 + $0x64] sm:$0xf]
  %v144 = vld [vmem:[%s1 + $0x68] sm:$0xf]
  %v145 = vld [vmem:[%s1 + $0x6c] sm:$0xf]
  %v146 = vld [vmem:[%s1 + $0x70] sm:$0xf]
  %v147 = vld [vmem:[%s1 + $0x74] sm:$0xf]
  %v148 = vld [vmem:[%s1 + $0x78] sm:$0xf]
  %v149 = vld [vmem:[%s1 + $0x7c] sm:$0xf]
  %v182 = vunpack.c.l.b16 %v86
  %v183 = vunpack.c.h.b16 %v86
  %v184 = vunpack.c.l.b16 %v87
  %v185 = vunpack.c.h.b16 %v87
  %v186 = vunpack.c.l.b16 %v88
  %v187 = vunpack.c.h.b16 %v88
  %v188 = vunpack.c.l.b16 %v89
  %v189 = vunpack.c.h.b16 %v89
  %v190 = vunpack.c.l.b16 %v90
  %v191 = vunpack.c.h.b16 %v90
  %v192 = vunpack.c.l.b16 %v91
  %v193 = vunpack.c.h.b16 %v91
  %v194 = vunpack.c.l.b16 %v92
  %v195 = vunpack.c.h.b16 %v92
  %v196 = vunpack.c.l.b16 %v93
  %v197 = vunpack.c.h.b16 %v93
  %v198 = vunpack.c.l.b16 %v94
  %v199 = vunpack.c.h.b16 %v94
  %v200 = vunpack.c.l.b16 %v95
  %v201 = vunpack.c.h.b16 %v95
  %v202 = vunpack.c.l.b16 %v96
  %v203 = vunpack.c.h.b16 %v96
  %v204 = vunpack.c.l.b16 %v97
  %v205 = vunpack.c.h.b16 %v97
  %v206 = vunpack.c.l.b16 %v98
  %v207 = vunpack.c.h.b16 %v98
  %v208 = vunpack.c.l.b16 %v99
  %v209 = vunpack.c.h.b16 %v99
  %v210 = vunpack.c.l.b16 %v100
  %v211 = vunpack.c.h.b16 %v100
  %v212 = vunpack.c.l.b16 %v101
  %v213 = vunpack.c.h.b16 %v101
  %v214 = vunpack.c.l.b16 %v102
  %v215 = vunpack.c.h.b16 %v102
  %v216 = vunpack.c.l.b16 %v103
  %v217 = vunpack.c.h.b16 %v103
  %v218 = vunpack.c.l.b16 %v104
  %v219 = vunpack.c.h.b16 %v104
  %v220 = vunpack.c.l.b16 %v105
  %v221 = vunpack.c.h.b16 %v105
  %v222 = vunpack.c.l.b16 %v106
  %v223 = vunpack.c.h.b16 %v106
  %v224 = vunpack.c.l.b16 %v107
  %v225 = vunpack.c.h.b16 %v107
  %v226 = vunpack.c.l.b16 %v108
  %v227 = vunpack.c.h.b16 %v108
  %v228 = vunpack.c.l.b16 %v109
  %v229 = vunpack.c.h.b16 %v109
  %v230 = vunpack.c.l.b16 %v110
  %v231 = vunpack.c.h.b16 %v110
  %v232 = vunpack.c.l.b16 %v111
  %v233 = vunpack.c.h.b16 %v111
  %v234 = vunpack.c.l.b16 %v112
  %v235 = vunpack.c.h.b16 %v112
  %v236 = vunpack.c.l.b16 %v113
  %v237 = vunpack.c.h.b16 %v113
  %v238 = vunpack.c.l.b16 %v114
  %v239 = vunpack.c.h.b16 %v114
  %v240 = vunpack.c.l.b16 %v115
  %v241 = vunpack.c.h.b16 %v115
  %v242 = vunpack.c.l.b16 %v116
  %v243 = vunpack.c.h.b16 %v116
  %v244 = vunpack.c.l.b16 %v117
  %v245 = vunpack.c.h.b16 %v117
  %v246 = vpack.c.b16 %v184, %v182
  %v247 = vpack.c.b16 %v185, %v183
  %v248 = vpack.c.b16 %v188, %v186
  %v249 = vpack.c.b16 %v189, %v187
  %v250 = vpack.c.b16 %v192, %v190
  %v251 = vpack.c.b16 %v193, %v191
  %v252 = vpack.c.b16 %v196, %v194
  %v253 = vpack.c.b16 %v197, %v195
  %v254 = vpack.c.b16 %v200, %v198
  %v255 = vpack.c.b16 %v201, %v199
  %v256 = vpack.c.b16 %v204, %v202
  %v257 = vpack.c.b16 %v205, %v203
  %v258 = vpack.c.b16 %v208, %v206
  %v259 = vpack.c.b16 %v209, %v207
  %v260 = vpack.c.b16 %v212, %v210
  %v261 = vpack.c.b16 %v213, %v211
  %v262 = vpack.c.b16 %v216, %v214
  %v263 = vpack.c.b16 %v217, %v215
  %v264 = vpack.c.b16 %v220, %v218
  %v265 = vpack.c.b16 %v221, %v219
  %v266 = vpack.c.b16 %v224, %v222
  %v267 = vpack.c.b16 %v225, %v223
  %v268 = vpack.c.b16 %v228, %v226
  %v269 = vpack.c.b16 %v229, %v227
  %v270 = vpack.c.b16 %v232, %v230
  %v271 = vpack.c.b16 %v233, %v231
  %v272 = vpack.c.b16 %v236, %v234
  %v273 = vpack.c.b16 %v237, %v235
  %v274 = vpack.c.b16 %v240, %v238
  %v275 = vpack.c.b16 %v241, %v239
  %v276 = vpack.c.b16 %v244, %v242
  %v277 = vpack.c.b16 %v245, %v243
  %v342 = vunpack.c.l.b16 %v118
  %v343 = vunpack.c.l.b16 %v119
  %v344 = vunpack.c.l.b16 %v120
  %v345 = vunpack.c.l.b16 %v121
  %v346 = vunpack.c.l.b16 %v122
  %v347 = vunpack.c.l.b16 %v123
  %v348 = vunpack.c.l.b16 %v124
  %v349 = vunpack.c.l.b16 %v125
  %v350 = vunpack.c.l.b16 %v126
  %v351 = vunpack.c.l.b16 %v127
  %v352 = vunpack.c.l.b16 %v128
  %v353 = vunpack.c.l.b16 %v129
  %v354 = vunpack.c.l.b16 %v130
  %v355 = vunpack.c.l.b16 %v131
  %v356 = vunpack.c.l.b16 %v132
  %v357 = vunpack.c.l.b16 %v133
  %v358 = vunpack.c.l.b16 %v134
  %v359 = vunpack.c.l.b16 %v135
  %v360 = vunpack.c.l.b16 %v136
  %v361 = vunpack.c.l.b16 %v137
  %v362 = vunpack.c.l.b16 %v138
  %v363 = vunpack.c.l.b16 %v139
  %v364 = vunpack.c.l.b16 %v140
  %v365 = vunpack.c.l.b16 %v141
  %v366 = vunpack.c.l.b16 %v142
  %v367 = vunpack.c.l.b16 %v143
  %v368 = vunpack.c.l.b16 %v144
  %v369 = vunpack.c.l.b16 %v145
  %v370 = vunpack.c.l.b16 %v146
  %v371 = vunpack.c.l.b16 %v147
  %v372 = vunpack.c.l.b16 %v148
  %v373 = vunpack.c.l.b16 %v149
  %v374 = vpack.c.b16 %v343, %v342
  %v375 = vpack.c.b16 %v345, %v344
  %v376 = vpack.c.b16 %v347, %v346
  %v377 = vpack.c.b16 %v349, %v348
  %v378 = vpack.c.b16 %v351, %v350
  %v379 = vpack.c.b16 %v353, %v352
  %v380 = vpack.c.b16 %v355, %v354
  %v381 = vpack.c.b16 %v357, %v356
  %v382 = vpack.c.b16 %v359, %v358
  %v383 = vpack.c.b16 %v361, %v360
  %v384 = vpack.c.b16 %v363, %v362
  %v385 = vpack.c.b16 %v365, %v364
  %v386 = vpack.c.b16 %v367, %v366
  %v387 = vpack.c.b16 %v369, %v368
  %v388 = vpack.c.b16 %v371, %v370
  %v389 = vpack.c.b16 %v373, %v372
  %406 = vmatprep.subr.bf16.mxu0 0
  %407 = vmatpush1.bf16.msra.mxu0 %v374
  %408 = vmatprep.subr.bf16.mxu0 0
  %409 = vmatpush1.bf16.msra.mxu0 %v375
  %410 = vmatprep.subr.bf16.mxu0 0
  %411 = vmatpush1.bf16.msra.mxu0 %v376
  %412 = vmatprep.subr.bf16.mxu0 0
  %413 = vmatpush1.bf16.msra.mxu0 %v377
  %414 = vmatprep.subr.bf16.mxu0 0
  %415 = vmatpush1.bf16.msra.mxu0 %v378
  %416 = vmatprep.subr.bf16.mxu0 0
  %417 = vmatpush1.bf16.msra.mxu0 %v379
  %418 = vmatprep.subr.bf16.mxu0 0
  %419 = vmatpush1.bf16.msra.mxu0 %v380
  %420 = vmatprep.subr.bf16.mxu0 0
  %421 = vmatpush1.bf16.msra.mxu0 %v381
  %422 = vmatprep.subr.bf16.mxu0 0
  %423 = vmatpush1.bf16.msra.mxu0 %v382
  %424 = vmatprep.subr.bf16.mxu0 0
  %425 = vmatpush1.bf16.msra.mxu0 %v383
  %426 = vmatprep.subr.bf16.mxu0 0
  %427 = vmatpush1.bf16.msra.mxu0 %v384
  %428 = vmatprep.subr.bf16.mxu0 0
  %429 = vmatpush1.bf16.msra.mxu0 %v385
  %430 = vmatprep.subr.bf16.mxu0 0
  %431 = vmatpush1.bf16.msra.mxu0 %v386
  %432 = vmatprep.subr.bf16.mxu0 0
  %433 = vmatpush1.bf16.msra.mxu0 %v387
  %434 = vmatprep.subr.bf16.mxu0 0
  %435 = vmatpush1.bf16.msra.mxu0 %v388
  %436 = vmatprep.subr.bf16.mxu0 0
  %437 = vmatpush1.bf16.msra.mxu0 %v389
  %438 = vmatprep.mubr.bf16.mxu0 %v247
  %439 = vmatmul.mubr.bf16.gmra.mrb[0].mxu0 %v246
  %v440 = vpop.f32.mrb[0].mxu0
  %v441 = vadd.f32 0.0, %v440
  %v442 = vpop.f32.mrb[0].mxu0
  %v443 = vpop.f32.mrb[0].mxu0
  %v444 = vadd.f32 0.0, %v443
  %v445 = vpop.f32.mrb[0].mxu0
  %446 = vmatprep.mubr.bf16.mxu0 %v249
  %447 = vmatmul.mubr.bf16.gmra.mrb[0].mxu0 %v248
  %v448 = vpop.f32.mrb[0].mxu0
  %v449 = vadd.f32 0.0, %v448
  %v450 = vpop.f32.mrb[0].mxu0
  %v451 = vpop.f32.mrb[0].mxu0
  %v452 = vadd.f32 0.0, %v451
  %v453 = vpop.f32.mrb[0].mxu0
  %454 = vmatprep.mubr.bf16.mxu0 %v251
  %455 = vmatmul.mubr.bf16.gmra.mrb[0].mxu0 %v250
  %v456 = vpop.f32.mrb[0].mxu0
  %v457 = vadd.f32 0.0, %v456
  %v458 = vpop.f32.mrb[0].mxu0
  %v459 = vpop.f32.mrb[0].mxu0
  %v460 = vadd.f32 0.0, %v459
  %v461 = vpop.f32.mrb[0].mxu0
  %462 = vmatprep.mubr.bf16.mxu0 %v253
  %463 = vmatmul.mubr.bf16.gmra.mrb[0].mxu0 %v252
  %v464 = vpop.f32.mrb[0].mxu0
  %v465 = vadd.f32 0.0, %v464
  %v466 = vpop.f32.mrb[0].mxu0
  %v467 = vpop.f32.mrb[0].mxu0
  %v468 = vadd.f32 0.0, %v467
  %v469 = vpop.f32.mrb[0].mxu0
  %470 = vmatprep.mubr.bf16.mxu0 %v255
  %471 = vmatmul.mubr.bf16.gmra.mrb[0].mxu0 %v254
  %v472 = vpop.f32.mrb[0].mxu0
  %v473 = vadd.f32 0.0, %v472
  %v474 = vpop.f32.mrb[0].mxu0
  %v475 = vpop.f32.mrb[0].mxu0
  %v476 = vadd.f32 0.0, %v475
  %v477 = vpop.f32.mrb[0].mxu0
  %478 = vmatprep.mubr.bf16.mxu0 %v257
  %479 = vmatmul.mubr.bf16.gmra.mrb[0].mxu0 %v256
  %v480 = vpop.f32.mrb[0].mxu0
  %v481 = vadd.f32 0.0, %v480
  %v482 = vpop.f32.mrb[0].mxu0
  %v483 = vpop.f32.mrb[0].mxu0
  %v484 = vadd.f32 0.0, %v483
  %v485 = vpop.f32.mrb[0].mxu0
  %486 = vmatprep.mubr.bf16.mxu0 %v259
  %487 = vmatmul.mubr.bf16.gmra.mrb[0].mxu0 %v258
  %v488 = vpop.f32.mrb[0].mxu0
  %v489 = vadd.f32 0.0, %v488
  %v490 = vpop.f32.mrb[0].mxu0
  %v491 = vpop.f32.mrb[0].mxu0
  %v492 = vadd.f32 0.0, %v491
  %v493 = vpop.f32.mrb[0].mxu0
  %494 = vmatprep.mubr.bf16.mxu0 %v261
  %495 = vmatmul.mubr.bf16.gmra.mrb[0].mxu0 %v260
  %v496 = vpop.f32.mrb[0].mxu0
  %v497 = vadd.f32 0.0, %v496
  %v498 = vpop.f32.mrb[0].mxu0
  %v499 = vpop.f32.mrb[0].mxu0
  %v500 = vadd.f32 0.0, %v499
  %v501 = vpop.f32.mrb[0].mxu0
  %502 = vmatprep.mubr.bf16.mxu0 %v263
  %503 = vmatmul.mubr.bf16.gmra.mrb[0].mxu0 %v262
  %v504 = vpop.f32.mrb[0].mxu0
  %v505 = vadd.f32 0.0, %v504
  %v506 = vpop.f32.mrb[0].mxu0
  %v507 = vpop.f32.mrb[0].mxu0
  %v508 = vadd.f32 0.0, %v507
  %v509 = vpop.f32.mrb[0].mxu0
  %510 = vmatprep.mubr.bf16.mxu0 %v265
  %511 = vmatmul.mubr.bf16.gmra.mrb[0].mxu0 %v264
  %v512 = vpop.f32.mrb[0].mxu0
  %v513 = vadd.f32 0.0, %v512
  %v514 = vpop.f32.mrb[0].mxu0
  %v515 = vpop.f32.mrb[0].mxu0
  %v516 = vadd.f32 0.0, %v515
  %v517 = vpop.f32.mrb[0].mxu0
  %518 = vmatprep.mubr.bf16.mxu0 %v267
  %519 = vmatmul.mubr.bf16.gmra.mrb[0].mxu0 %v266
  %v520 = vpop.f32.mrb[0].mxu0
  %v521 = vadd.f32 0.0, %v520
  %v522 = vpop.f32.mrb[0].mxu0
  %v523 = vpop.f32.mrb[0].mxu0
  %v524 = vadd.f32 0.0, %v523
  %v525 = vpop.f32.mrb[0].mxu0
  %526 = vmatprep.mubr.bf16.mxu0 %v269
  %527 = vmatmul.mubr.bf16.gmra.mrb[0].mxu0 %v268
  %v528 = vpop.f32.mrb[0].mxu0
  %v529 = vadd.f32 0.0, %v528
  %v530 = vpop.f32.mrb[0].mxu0
  %v531 = vpop.f32.mrb[0].mxu0
  %v532 = vadd.f32 0.0, %v531
  %v533 = vpop.f32.mrb[0].mxu0
  %534 = vmatprep.mubr.bf16.mxu0 %v271
  %535 = vmatmul.mubr.bf16.gmra.mrb[0].mxu0 %v270
  %v536 = vpop.f32.mrb[0].mxu0
  %v537 = vadd.f32 0.0, %v536
  %v538 = vpop.f32.mrb[0].mxu0
  %v539 = vpop.f32.mrb[0].mxu0
  %v540 = vadd.f32 0.0, %v539
  %v541 = vpop.f32.mrb[0].mxu0
  %542 = vmatprep.mubr.bf16.mxu0 %v273
  %543 = vmatmul.mubr.bf16.gmra.mrb[0].mxu0 %v272
  %v544 = vpop.f32.mrb[0].mxu0
  %v545 = vadd.f32 0.0, %v544
  %v546 = vpop.f32.mrb[0].mxu0
  %v547 = vpop.f32.mrb[0].mxu0
  %v548 = vadd.f32 0.0, %v547
  %v549 = vpop.f32.mrb[0].mxu0
  %550 = vmatprep.mubr.bf16.mxu0 %v275
  %551 = vmatmul.mubr.bf16.gmra.mrb[0].mxu0 %v274
  %v552 = vpop.f32.mrb[0].mxu0
  %v553 = vadd.f32 0.0, %v552
  %v554 = vpop.f32.mrb[0].mxu0
  %v555 = vpop.f32.mrb[0].mxu0
  %v556 = vadd.f32 0.0, %v555
  %v557 = vpop.f32.mrb[0].mxu0
  %558 = vmatprep.mubr.bf16.mxu0 %v277
  %559 = vmatmul.mubr.bf16.gmra.mrb[0].mxu0 %v276
  %v560 = vpop.f32.mrb[0].mxu0
  %v561 = vadd.f32 0.0, %v560
  %v562 = vpop.f32.mrb[0].mxu0
  %v563 = vpop.f32.mrb[0].mxu0
  %v564 = vadd.f32 0.0, %v563
  %v565 = vpop.f32.mrb[0].mxu0
  %566 = vdwg.mxu0
  %v567 = vadd.f32 %v54, %v441
  %v568 = vadd.f32 %v55, %v444
  %v569 = vadd.f32 %v56, %v449
  %v570 = vadd.f32 %v57, %v452
  %v571 = vadd.f32 %v58, %v457
  %v572 = vadd.f32 %v59, %v460
  %v573 = vadd.f32 %v60, %v465
  %v574 = vadd.f32 %v61, %v468
  %v575 = vadd.f32 %v62, %v473
  %v576 = vadd.f32 %v63, %v476
  %v577 = vadd.f32 %v64, %v481
  %v578 = vadd.f32 %v65, %v484
  %v579 = vadd.f32 %v66, %v489
  %v580 = vadd.f32 %v67, %v492
  %v581 = vadd.f32 %v68, %v497
  %v582 = vadd.f32 %v69, %v500
  %v583 = vadd.f32 %v70, %v505
  %v584 = vadd.f32 %v71, %v508
  %v585 = vadd.f32 %v72, %v513
  %v586 = vadd.f32 %v73, %v516
  %v587 = vadd.f32 %v74, %v521
  %v588 = vadd.f32 %v75, %v524
  %v589 = vadd.f32 %v76, %v529
  %v590 = vadd.f32 %v77, %v532
  %v591 = vadd.f32 %v78, %v537
  %v592 = vadd.f32 %v79, %v540
  %v593 = vadd.f32 %v80, %v545
  %v594 = vadd.f32 %v81, %v548
  %v595 = vadd.f32 %v82, %v553
  %v596 = vadd.f32 %v83, %v556
  %v597 = vadd.f32 %v84, %v561
  %v598 = vadd.f32 %v85, %v564
  %599 = vst [vmem:[#allocation2] sm:$0xff] %v567
  %600 = vst [vmem:[#allocation2 + $0x8] sm:$0xff] %v568
  %601 = vst [vmem:[#allocation2 + $0x10] sm:$0xff] %v569
  %602 = vst [vmem:[#allocation2 + $0x18] sm:$0xff] %v570
  %603 = vst [vmem:[#allocation2 + $0x20] sm:$0xff] %v571
  %604 = vst [vmem:[#allocation2 + $0x28] sm:$0xff] %v572
  %605 = vst [vmem:[#allocation2 + $0x30] sm:$0xff] %v573
  %606 = vst [vmem:[#allocation2 + $0x38] sm:$0xff] %v574
  %607 = vst [vmem:[#allocation2 + $0x40] sm:$0xff] %v575
  %608 = vst [vmem:[#allocation2 + $0x48] sm:$0xff] %v576
  %609 = vst [vmem:[#allocation2 + $0x50] sm:$0xff] %v577
  %610 = vst [vmem:[#allocation2 + $0x58] sm:$0xff] %v578
  %611 = vst [vmem:[#allocation2 + $0x60] sm:$0xff] %v579
  %612 = vst [vmem:[#allocation2 + $0x68] sm:$0xff] %v580
  %613 = vst [vmem:[#allocation2 + $0x70] sm:$0xff] %v581
  %614 = vst [vmem:[#allocation2 + $0x78] sm:$0xff] %v582
  %615 = vst [vmem:[#allocation2 + $0x80] sm:$0xff] %v583
  %616 = vst [vmem:[#allocation2 + $0x88] sm:$0xff] %v584
  %617 = vst [vmem:[#allocation2 + $0x90] sm:$0xff] %v585
  %618 = vst [vmem:[#allocation2 + $0x98] sm:$0xff] %v586
  %619 = vst [vmem:[#allocation2 + $0xa0] sm:$0xff] %v587
  %620 = vst [vmem:[#allocation2 + $0xa8] sm:$0xff] %v588
  %621 = vst [vmem:[#allocation2 + $0xb0] sm:$0xff] %v589
  %622 = vst [vmem:[#allocation2 + $0xb8] sm:$0xff] %v590
  %623 = vst [vmem:[#allocation2 + $0xc0] sm:$0xff] %v591
  %624 = vst [vmem:[#allocation2 + $0xc8] sm:$0xff] %v592
  %625 = vst [vmem:[#allocation2 + $0xd0] sm:$0xff] %v593
  %626 = vst [vmem:[#allocation2 + $0xd8] sm:$0xff] %v594
  %627 = vst [vmem:[#allocation2 + $0xe0] sm:$0xff] %v595
  %628 = vst [vmem:[#allocation2 + $0xe8] sm:$0xff] %v596
  %629 = vst [vmem:[#allocation2 + $0xf0] sm:$0xff] %v597
  %630 = vst [vmem:[#allocation2 + $0xf8] sm:$0xff] %v598
  // Predicated region
  $region22: #{controlled_gde_forward.4} parent=0 // pred_check
    %p631 = pneg %p18
  $region23: #{controlled_gde_forward.4} parent=0 // pred_check_branch
    %633 = sbr.rel (%p631) target = $region25
  $region24: #{controlled_gde_forward.4} parent=0 // pred_region
    %v634 = vld [vmem:[#allocation2] sm:$0xff]
    %v635 = vld [vmem:[#allocation2 + $0x8] sm:$0xff]
    %v636 = vld [vmem:[#allocation2 + $0x10] sm:$0xff]
    %v637 = vld [vmem:[#allocation2 + $0x18] sm:$0xff]
    %v638 = vld [vmem:[#allocation2 + $0x20] sm:$0xff]
    %v639 = vld [vmem:[#allocation2 + $0x28] sm:$0xff]
    %v640 = vld [vmem:[#allocation2 + $0x30] sm:$0xff]
    %v641 = vld [vmem:[#allocation2 + $0x38] sm:$0xff]
    %v642 = vld [vmem:[#allocation2 + $0x40] sm:$0xff]
    %v643 = vld [vmem:[#allocation2 + $0x48] sm:$0xff]
    %v644 = vld [vmem:[#allocation2 + $0x50] sm:$0xff]
    %v645 = vld [vmem:[#allocation2 + $0x58] sm:$0xff]
    %v646 = vld [vmem:[#allocation2 + $0x60] sm:$0xff]
    %v647 = vld [vmem:[#allocation2 + $0x68] sm:$0xff]
    %v648 = vld [vmem:[#allocation2 + $0x70] sm:$0xff]
    %v649 = vld [vmem:[#allocation2 + $0x78] sm:$0xff]
    %v650 = vld [vmem:[#allocation2 + $0x80] sm:$0xff]
    %v651 = vld [vmem:[#allocation2 + $0x88] sm:$0xff]
    %v652 = vld [vmem:[#allocation2 + $0x90] sm:$0xff]
    %v653 = vld [vmem:[#allocation2 + $0x98] sm:$0xff]
    %v654 = vld [vmem:[#allocation2 + $0xa0] sm:$0xff]
    %v655 = vld [vmem:[#allocation2 + $0xa8] sm:$0xff]
    %v656 = vld [vmem:[#allocation2 + $0xb0] sm:$0xff]
    %v657 = vld [vmem:[#allocation2 + $0xb8] sm:$0xff]
    %v658 = vld [vmem:[#allocation2 + $0xc0] sm:$0xff]
    %v659 = vld [vmem:[#allocation2 + $0xc8] sm:$0xff]
    %v660 = vld [vmem:[#allocation2 + $0xd0] sm:$0xff]
    %v661 = vld [vmem:[#allocation2 + $0xd8] sm:$0xff]
    %v662 = vld [vmem:[#allocation2 + $0xe0] sm:$0xff]
    %v663 = vld [vmem:[#allocation2 + $0xe8] sm:$0xff]
    %v664 = vld [vmem:[#allocation2 + $0xf0] sm:$0xff]
    %v665 = vld [vmem:[#allocation2 + $0xf8] sm:$0xff]
    %v666 = vld [vmem:[%s2] sm:$0x1]
    %v668 = vlaneseq
    %v669 = vshrl.u32 %v668, 7
    %v670 = vsub.s32 0, %v669
    %v671 = vrot.slane %v666, %v670
    %v673 = vadd.f32 %v634, %v671
    %v674 = vadd.f32 %v635, %v671
    %v675 = vadd.f32 %v636, %v671
    %v676 = vadd.f32 %v637, %v671
    %v677 = vadd.f32 %v638, %v671
    %v678 = vadd.f32 %v639, %v671
    %v679 = vadd.f32 %v640, %v671
    %v680 = vadd.f32 %v641, %v671
    %v681 = vadd.f32 %v642, %v671
    %v682 = vadd.f32 %v643, %v671
    %v683 = vadd.f32 %v644, %v671
    %v684 = vadd.f32 %v645, %v671
    %v685 = vadd.f32 %v646, %v671
    %v686 = vadd.f32 %v647, %v671
    %v687 = vadd.f32 %v648, %v671
    %v688 = vadd.f32 %v649, %v671
    %v689 = vadd.f32 %v650, %v671
    %v690 = vadd.f32 %v651, %v671
    %v691 = vadd.f32 %v652, %v671
    %v692 = vadd.f32 %v653, %v671
    %v693 = vadd.f32 %v654, %v671
    %v694 = vadd.f32 %v655, %v671
    %v695 = vadd.f32 %v656, %v671
    %v696 = vadd.f32 %v657, %v671
    %v697 = vadd.f32 %v658, %v671
    %v698 = vadd.f32 %v659, %v671
    %v699 = vadd.f32 %v660, %v671
    %v700 = vadd.f32 %v661, %v671
    %v701 = vadd.f32 %v662, %v671
    %v702 = vadd.f32 %v663, %v671
    %v703 = vadd.f32 %v664, %v671
    %v704 = vadd.f32 %v665, %v671
    %v705 = vmax.f32 %v673, 0.0
    %v706 = vmax.f32 %v674, 0.0
    %v707 = vmax.f32 %v675, 0.0
    %v708 = vmax.f32 %v676, 0.0
    %v709 = vmax.f32 %v677, 0.0
    %v710 = vmax.f32 %v678, 0.0
    %v711 = vmax.f32 %v679, 0.0
    %v712 = vmax.f32 %v680, 0.0
    %v713 = vmax.f32 %v681, 0.0
    %v714 = vmax.f32 %v682, 0.0
    %v715 = vmax.f32 %v683, 0.0
    %v716 = vmax.f32 %v684, 0.0
    %v717 = vmax.f32 %v685, 0.0
    %v718 = vmax.f32 %v686, 0.0
    %v719 = vmax.f32 %v687, 0.0
    %v720 = vmax.f32 %v688, 0.0
    %v721 = vmax.f32 %v689, 0.0
    %v722 = vmax.f32 %v690, 0.0
    %v723 = vmax.f32 %v691, 0.0
    %v724 = vmax.f32 %v692, 0.0
    %v725 = vmax.f32 %v693, 0.0
    %v726 = vmax.f32 %v694, 0.0
    %v727 = vmax.f32 %v695, 0.0
    %v728 = vmax.f32 %v696, 0.0
    %v729 = vmax.f32 %v697, 0.0
    %v730 = vmax.f32 %v698, 0.0
    %v731 = vmax.f32 %v699, 0.0
    %v732 = vmax.f32 %v700, 0.0
    %v733 = vmax.f32 %v701, 0.0
    %v734 = vmax.f32 %v702, 0.0
    %v735 = vmax.f32 %v703, 0.0
    %v736 = vmax.f32 %v704, 0.0
    %v737 = vpack.c.bf16 %v706, %v705
    %v738 = vpack.c.bf16 %v708, %v707
    %v739 = vpack.c.bf16 %v710, %v709
    %v740 = vpack.c.bf16 %v712, %v711
    %v741 = vpack.c.bf16 %v714, %v713
    %v742 = vpack.c.bf16 %v716, %v715
    %v743 = vpack.c.bf16 %v718, %v717
    %v744 = vpack.c.bf16 %v720, %v719
    %v745 = vpack.c.bf16 %v722, %v721
    %v746 = vpack.c.bf16 %v724, %v723
    %v747 = vpack.c.bf16 %v726, %v725
    %v748 = vpack.c.bf16 %v728, %v727
    %v749 = vpack.c.bf16 %v730, %v729
    %v750 = vpack.c.bf16 %v732, %v731
    %v751 = vpack.c.bf16 %v734, %v733
    %v752 = vpack.c.bf16 %v736, %v735
    %v753 = vld [vmem:[%s3] sm:$0xf]
    %v754 = vld [vmem:[%s3 + $0x4] sm:$0xf]
    %v755 = vld [vmem:[%s3 + $0x8] sm:$0xf]
    %v756 = vld [vmem:[%s3 + $0xc] sm:$0xf]
    %v757 = vld [vmem:[%s3 + $0x10] sm:$0xf]
    %v758 = vld [vmem:[%s3 + $0x14] sm:$0xf]
    %v759 = vld [vmem:[%s3 + $0x18] sm:$0xf]
    %v760 = vld [vmem:[%s3 + $0x1c] sm:$0xf]
    %v761 = vld [vmem:[%s3 + $0x20] sm:$0xf]
    %v762 = vld [vmem:[%s3 + $0x24] sm:$0xf]
    %v763 = vld [vmem:[%s3 + $0x28] sm:$0xf]
    %v764 = vld [vmem:[%s3 + $0x2c] sm:$0xf]
    %v765 = vld [vmem:[%s3 + $0x30] sm:$0xf]
    %v766 = vld [vmem:[%s3 + $0x34] sm:$0xf]
    %v767 = vld [vmem:[%s3 + $0x38] sm:$0xf]
    %v768 = vld [vmem:[%s3 + $0x3c] sm:$0xf]
    %v785 = vunpack.c.l.b16 %v753
    %v786 = vunpack.c.l.b16 %v754
    %v787 = vunpack.c.l.b16 %v755
    %v788 = vunpack.c.l.b16 %v756
    %v789 = vunpack.c.l.b16 %v757
    %v790 = vunpack.c.l.b16 %v758
    %v791 = vunpack.c.l.b16 %v759
    %v792 = vunpack.c.l.b16 %v760
    %v793 = vunpack.c.l.b16 %v761
    %v794 = vunpack.c.l.b16 %v762
    %v795 = vunpack.c.l.b16 %v763
    %v796 = vunpack.c.l.b16 %v764
    %v797 = vunpack.c.l.b16 %v765
    %v798 = vunpack.c.l.b16 %v766
    %v799 = vunpack.c.l.b16 %v767
    %v800 = vunpack.c.l.b16 %v768
    %v801 = vpack.c.b16 %v786, %v785
    %v802 = vpack.c.b16 %v788, %v787
    %v803 = vpack.c.b16 %v790, %v789
    %v804 = vpack.c.b16 %v792, %v791
    %v805 = vpack.c.b16 %v794, %v793
    %v806 = vpack.c.b16 %v796, %v795
    %v807 = vpack.c.b16 %v798, %v797
    %v808 = vpack.c.b16 %v800, %v799
    %817 = vmatprep.subr.bf16.mxu0 0
    %818 = vmatpush1.bf16.msra.mxu0 %v801
    %819 = vmatprep.subr.bf16.mxu0 0
    %820 = vmatpush1.bf16.msra.mxu0 %v802
    %821 = vmatprep.subr.bf16.mxu0 0
    %822 = vmatpush1.bf16.msra.mxu0 %v803
    %823 = vmatprep.subr.bf16.mxu0 0
    %824 = vmatpush1.bf16.msra.mxu0 %v804
    %825 = vmatprep.subr.bf16.mxu0 0
    %826 = vmatpush1.bf16.msra.mxu0 %v805
    %827 = vmatprep.subr.bf16.mxu0 0
    %828 = vmatpush1.bf16.msra.mxu0 %v806
    %829 = vmatprep.subr.bf16.mxu0 0
    %830 = vmatpush1.bf16.msra.mxu0 %v807
    %831 = vmatprep.subr.bf16.mxu0 0
    %832 = vmatpush1.bf16.msra.mxu0 %v808
    %833 = vmatprep.subr.bf16.mxu0 0
    %834 = vmatpush1.bf16.msra.mxu0 0
    %835 = vmatprep.subr.bf16.mxu0 0
    %836 = vmatpush1.bf16.msra.mxu0 0
    %837 = vmatprep.subr.bf16.mxu0 0
    %838 = vmatpush1.bf16.msra.mxu0 0
    %839 = vmatprep.subr.bf16.mxu0 0
    %840 = vmatpush1.bf16.msra.mxu0 0
    %841 = vmatprep.subr.bf16.mxu0 0
    %842 = vmatpush1.bf16.msra.mxu0 0
    %843 = vmatprep.subr.bf16.mxu0 0
    %844 = vmatpush1.bf16.msra.mxu0 0
    %845 = vmatprep.subr.bf16.mxu0 0
    %846 = vmatpush1.bf16.msra.mxu0 0
    %847 = vmatprep.subr.bf16.mxu0 0
    %848 = vmatpush1.bf16.msra.mxu0 0
    %849 = vmatprep.mubr.bf16.mxu0 0
    %850 = vmatmul.mubr.bf16.gmra.mrb[0].mxu0 %v737
    %v851 = vpop.f32.mrb[0].mxu0
    %v852 = vadd.f32 0.0, %v851
    %v853 = vpop.f32.mrb[0].mxu0
    %v854 = vpop.f32.mrb[0].mxu0
    %v855 = vadd.f32 0.0, %v854
    %v856 = vpop.f32.mrb[0].mxu0
    %857 = vmatprep.mubr.bf16.mxu0 0
    %858 = vmatmul.mubr.bf16.gmra.mrb[0].mxu0 %v738
    %v859 = vpop.f32.mrb[0].mxu0
    %v860 = vadd.f32 0.0, %v859
    %v861 = vpop.f32.mrb[0].mxu0
    %v862 = vpop.f32.mrb[0].mxu0
    %v863 = vadd.f32 0.0, %v862
    %v864 = vpop.f32.mrb[0].mxu0
    %865 = vmatprep.mubr.bf16.mxu0 0
    %866 = vmatmul.mubr.bf16.gmra.mrb[0].mxu0 %v739
    %v867 = vpop.f32.mrb[0].mxu0
    %v868 = vadd.f32 0.0, %v867
    %v869 = vpop.f32.mrb[0].mxu0
    %v870 = vpop.f32.mrb[0].mxu0
    %v871 = vadd.f32 0.0, %v870
    %v872 = vpop.f32.mrb[0].mxu0
    %873 = vmatprep.mubr.bf16.mxu0 0
    %874 = vmatmul.mubr.bf16.gmra.mrb[0].mxu0 %v740
    %v875 = vpop.f32.mrb[0].mxu0
    %v876 = vadd.f32 0.0, %v875
    %v877 = vpop.f32.mrb[0].mxu0
    %v878 = vpop.f32.mrb[0].mxu0
    %v879 = vadd.f32 0.0, %v878
    %v880 = vpop.f32.mrb[0].mxu0
    %881 = vmatprep.mubr.bf16.mxu0 0
    %882 = vmatmul.mubr.bf16.gmra.mrb[0].mxu0 %v741
    %v883 = vpop.f32.mrb[0].mxu0
    %v884 = vadd.f32 0.0, %v883
    %v885 = vpop.f32.mrb[0].mxu0
    %v886 = vpop.f32.mrb[0].mxu0
    %v887 = vadd.f32 0.0, %v886
    %v888 = vpop.f32.mrb[0].mxu0
    %889 = vmatprep.mubr.bf16.mxu0 0
    %890 = vmatmul.mubr.bf16.gmra.mrb[0].mxu0 %v742
    %v891 = vpop.f32.mrb[0].mxu0
    %v892 = vadd.f32 0.0, %v891
    %v893 = vpop.f32.mrb[0].mxu0
    %v894 = vpop.f32.mrb[0].mxu0
    %v895 = vadd.f32 0.0, %v894
    %v896 = vpop.f32.mrb[0].mxu0
    %897 = vmatprep.mubr.bf16.mxu0 0
    %898 = vmatmul.mubr.bf16.gmra.mrb[0].mxu0 %v743
    %v899 = vpop.f32.mrb[0].mxu0
    %v900 = vadd.f32 0.0, %v899
    %v901 = vpop.f32.mrb[0].mxu0
    %v902 = vpop.f32.mrb[0].mxu0
    %v903 = vadd.f32 0.0, %v902
    %v904 = vpop.f32.mrb[0].mxu0
    %905 = vmatprep.mubr.bf16.mxu0 0
    %906 = vmatmul.mubr.bf16.gmra.mrb[0].mxu0 %v744
    %v907 = vpop.f32.mrb[0].mxu0
    %v908 = vadd.f32 0.0, %v907
    %v909 = vpop.f32.mrb[0].mxu0
    %v910 = vpop.f32.mrb[0].mxu0
    %v911 = vadd.f32 0.0, %v910
    %v912 = vpop.f32.mrb[0].mxu0
    %913 = vmatprep.mubr.bf16.mxu0 0
    %914 = vmatmul.mubr.bf16.gmra.mrb[0].mxu0 %v745
    %v915 = vpop.f32.mrb[0].mxu0
    %v916 = vadd.f32 0.0, %v915
    %v917 = vpop.f32.mrb[0].mxu0
    %v918 = vpop.f32.mrb[0].mxu0
    %v919 = vadd.f32 0.0, %v918
    %v920 = vpop.f32.mrb[0].mxu0
    %921 = vmatprep.mubr.bf16.mxu0 0
    %922 = vmatmul.mubr.bf16.gmra.mrb[0].mxu0 %v746
    %v923 = vpop.f32.mrb[0].mxu0
    %v924 = vadd.f32 0.0, %v923
    %v925 = vpop.f32.mrb[0].mxu0
    %v926 = vpop.f32.mrb[0].mxu0
    %v927 = vadd.f32 0.0, %v926
    %v928 = vpop.f32.mrb[0].mxu0
    %929 = vmatprep.mubr.bf16.mxu0 0
    %930 = vmatmul.mubr.bf16.gmra.mrb[0].mxu0 %v747
    %v931 = vpop.f32.mrb[0].mxu0
    %v932 = vadd.f32 0.0, %v931
    %v933 = vpop.f32.mrb[0].mxu0
    %v934 = vpop.f32.mrb[0].mxu0
    %v935 = vadd.f32 0.0, %v934
    %v936 = vpop.f32.mrb[0].mxu0
    %937 = vmatprep.mubr.bf16.mxu0 0
    %938 = vmatmul.mubr.bf16.gmra.mrb[0].mxu0 %v748
    %v939 = vpop.f32.mrb[0].mxu0
    %v940 = vadd.f32 0.0, %v939
    %v941 = vpop.f32.mrb[0].mxu0
    %v942 = vpop.f32.mrb[0].mxu0
    %v943 = vadd.f32 0.0, %v942
    %v944 = vpop.f32.mrb[0].mxu0
    %945 = vmatprep.mubr.bf16.mxu0 0
    %946 = vmatmul.mubr.bf16.gmra.mrb[0].mxu0 %v749
    %v947 = vpop.f32.mrb[0].mxu0
    %v948 = vadd.f32 0.0, %v947
    %v949 = vpop.f32.mrb[0].mxu0
    %v950 = vpop.f32.mrb[0].mxu0
    %v951 = vadd.f32 0.0, %v950
    %v952 = vpop.f32.mrb[0].mxu0
    %953 = vmatprep.mubr.bf16.mxu0 0
    %954 = vmatmul.mubr.bf16.gmra.mrb[0].mxu0 %v750
    %v955 = vpop.f32.mrb[0].mxu0
    %v956 = vadd.f32 0.0, %v955
    %v957 = vpop.f32.mrb[0].mxu0
    %v958 = vpop.f32.mrb[0].mxu0
    %v959 = vadd.f32 0.0, %v958
    %v960 = vpop.f32.mrb[0].mxu0
    %961 = vmatprep.mubr.bf16.mxu0 0
    %962 = vmatmul.mubr.bf16.gmra.mrb[0].mxu0 %v751
    %v963 = vpop.f32.mrb[0].mxu0
    %v964 = vadd.f32 0.0, %v963
    %v965 = vpop.f32.mrb[0].mxu0
    %v966 = vpop.f32.mrb[0].mxu0
    %v967 = vadd.f32 0.0, %v966
    %v968 = vpop.f32.mrb[0].mxu0
    %969 = vmatprep.mubr.bf16.mxu0 0
    %970 = vmatmul.mubr.bf16.gmra.mrb[0].mxu0 %v752
    %v971 = vpop.f32.mrb[0].mxu0
    %v972 = vadd.f32 0.0, %v971
    %v973 = vpop.f32.mrb[0].mxu0
    %v974 = vpop.f32.mrb[0].mxu0
    %v975 = vadd.f32 0.0, %v974
    %v976 = vpop.f32.mrb[0].mxu0
    %977 = vdwg.mxu0
    %v978 = vpack.c.bf16 %v855, %v852
    %v979 = vpack.c.bf16 %v863, %v860
    %v980 = vpack.c.bf16 %v871, %v868
    %v981 = vpack.c.bf16 %v879, %v876
    %v982 = vpack.c.bf16 %v887, %v884
    %v983 = vpack.c.bf16 %v895, %v892
    %v984 = vpack.c.bf16 %v903, %v900
    %v985 = vpack.c.bf16 %v911, %v908
    %v986 = vpack.c.bf16 %v919, %v916
    %v987 = vpack.c.bf16 %v927, %v924
    %v988 = vpack.c.bf16 %v935, %v932
    %v989 = vpack.c.bf16 %v943, %v940
    %v990 = vpack.c.bf16 %v951, %v948
    %v991 = vpack.c.bf16 %v959, %v956
    %v992 = vpack.c.bf16 %v967, %v964
    %v993 = vpack.c.bf16 %v975, %v972
    %v1010 = vunpack.c.l.b16 %v978
    %v1011 = vunpack.c.h.b16 %v978
    %v1012 = vunpack.c.l.b16 %v979
    %v1013 = vunpack.c.h.b16 %v979
    %v1014 = vunpack.c.l.b16 %v980
    %v1015 = vunpack.c.h.b16 %v980
    %v1016 = vunpack.c.l.b16 %v981
    %v1017 = vunpack.c.h.b16 %v981
    %v1018 = vunpack.c.l.b16 %v982
    %v1019 = vunpack.c.h.b16 %v982
    %v1020 = vunpack.c.l.b16 %v983
    %v1021 = vunpack.c.h.b16 %v983
    %v1022 = vunpack.c.l.b16 %v984
    %v1023 = vunpack.c.h.b16 %v984
    %v1024 = vunpack.c.l.b16 %v985
    %v1025 = vunpack.c.h.b16 %v985
    %v1026 = vunpack.c.l.b16 %v986
    %v1027 = vunpack.c.h.b16 %v986
    %v1028 = vunpack.c.l.b16 %v987
    %v1029 = vunpack.c.h.b16 %v987
    %v1030 = vunpack.c.l.b16 %v988
    %v1031 = vunpack.c.h.b16 %v988
    %v1032 = vunpack.c.l.b16 %v989
    %v1033 = vunpack.c.h.b16 %v989
    %v1034 = vunpack.c.l.b16 %v990
    %v1035 = vunpack.c.h.b16 %v990
    %v1036 = vunpack.c.l.b16 %v991
    %v1037 = vunpack.c.h.b16 %v991
    %v1038 = vunpack.c.l.b16 %v992
    %v1039 = vunpack.c.h.b16 %v992
    %v1040 = vunpack.c.l.b16 %v993
    %v1041 = vunpack.c.h.b16 %v993
    %v1042 = vpack.c.b16 %v1010, %v1010
    %v1043 = vpack.c.b16 %v1011, %v1011
    %v1044 = vpack.c.b16 %v1012, %v1012
    %v1045 = vpack.c.b16 %v1013, %v1013
    %v1046 = vpack.c.b16 %v1014, %v1014
    %v1047 = vpack.c.b16 %v1015, %v1015
    %v1048 = vpack.c.b16 %v1016, %v1016
    %v1049 = vpack.c.b16 %v1017, %v1017
    %v1050 = vpack.c.b16 %v1018, %v1018
    %v1051 = vpack.c.b16 %v1019, %v1019
    %v1052 = vpack.c.b16 %v1020, %v1020
    %v1053 = vpack.c.b16 %v1021, %v1021
    %v1054 = vpack.c.b16 %v1022, %v1022
    %v1055 = vpack.c.b16 %v1023, %v1023
    %v1056 = vpack.c.b16 %v1024, %v1024
    %v1057 = vpack.c.b16 %v1025, %v1025
    %v1058 = vpack.c.b16 %v1026, %v1026
    %v1059 = vpack.c.b16 %v1027, %v1027
    %v1060 = vpack.c.b16 %v1028, %v1028
    %v1061 = vpack.c.b16 %v1029, %v1029
    %v1062 = vpack.c.b16 %v1030, %v1030
    %v1063 = vpack.c.b16 %v1031, %v1031
    %v1064 = vpack.c.b16 %v1032, %v1032
    %v1065 = vpack.c.b16 %v1033, %v1033
    %v1066 = vpack.c.b16 %v1034, %v1034
    %v1067 = vpack.c.b16 %v1035, %v1035
    %v1068 = vpack.c.b16 %v1036, %v1036
    %v1069 = vpack.c.b16 %v1037, %v1037
    %v1070 = vpack.c.b16 %v1038, %v1038
    %v1071 = vpack.c.b16 %v1039, %v1039
    %v1072 = vpack.c.b16 %v1040, %v1040
    %v1073 = vpack.c.b16 %v1041, %v1041
    %1106 = vst [vmem:[%s4] sm:$0xf] %v1042
    %1107 = vst [vmem:[%s4 + $0x4] sm:$0xf] %v1043
    %1108 = vst [vmem:[%s4 + $0x8] sm:$0xf] %v1044
    %1109 = vst [vmem:[%s4 + $0xc] sm:$0xf] %v1045
    %1110 = vst [vmem:[%s4 + $0x10] sm:$0xf] %v1046
    %1111 = vst [vmem:[%s4 + $0x14] sm:$0xf] %v1047
    %1112 = vst [vmem:[%s4 + $0x18] sm:$0xf] %v1048
    %1113 = vst [vmem:[%s4 + $0x1c] sm:$0xf] %v1049
    %1114 = vst [vmem:[%s4 + $0x20] sm:$0xf] %v1050
    %1115 = vst [vmem:[%s4 + $0x24] sm:$0xf] %v1051
    %1116 = vst [vmem:[%s4 + $0x28] sm:$0xf] %v1052
    %1117 = vst [vmem:[%s4 + $0x2c] sm:$0xf] %v1053
    %1118 = vst [vmem:[%s4 + $0x30] sm:$0xf] %v1054
    %1119 = vst [vmem:[%s4 + $0x34] sm:$0xf] %v1055
    %1120 = vst [vmem:[%s4 + $0x38] sm:$0xf] %v1056
    %1121 = vst [vmem:[%s4 + $0x3c] sm:$0xf] %v1057
    %1122 = vst [vmem:[%s4 + $0x40] sm:$0xf] %v1058
    %1123 = vst [vmem:[%s4 + $0x44] sm:$0xf] %v1059
    %1124 = vst [vmem:[%s4 + $0x48] sm:$0xf] %v1060
    %1125 = vst [vmem:[%s4 + $0x4c] sm:$0xf] %v1061
    %1126 = vst [vmem:[%s4 + $0x50] sm:$0xf] %v1062
    %1127 = vst [vmem:[%s4 + $0x54] sm:$0xf] %v1063
    %1128 = vst [vmem:[%s4 + $0x58] sm:$0xf] %v1064
    %1129 = vst [vmem:[%s4 + $0x5c] sm:$0xf] %v1065
    %1130 = vst [vmem:[%s4 + $0x60] sm:$0xf] %v1066
    %1131 = vst [vmem:[%s4 + $0x64] sm:$0xf] %v1067
    %1132 = vst [vmem:[%s4 + $0x68] sm:$0xf] %v1068
    %1133 = vst [vmem:[%s4 + $0x6c] sm:$0xf] %v1069
    %1134 = vst [vmem:[%s4 + $0x70] sm:$0xf] %v1070
    %1135 = vst [vmem:[%s4 + $0x74] sm:$0xf] %v1071
    %1136 = vst [vmem:[%s4 + $0x78] sm:$0xf] %v1072
    %1137 = vst [vmem:[%s4 + $0x7c] sm:$0xf] %v1073
  $region25: #{controlled_gde_forward.4} parent=0 // pred_fallthru
    _
  // Predicated region
  $region26: #{controlled_gde_forward.4} parent=0 // pred_check
    _
  $region27: #{controlled_gde_forward.4} parent=0 // pred_check_branch
    %1139 = sbr.rel (0) target = $region29
  $region28: #{controlled_gde_forward.4} parent=0 // pred_region
    _
  $region29: #{controlled_gde_forward.4} parent=0 // pred_fallthru
    _
  // Predicated region
  $region30: #{controlled_gde_forward.4} parent=0 // pred_check
    _
  $region31: #{controlled_gde_forward.4} parent=0 // pred_check_branch
    %1141 = sbr.rel (0) target = $region33
  $region32: #{controlled_gde_forward.4} parent=0 // pred_region
    _
  $region33: #{controlled_gde_forward.4} parent=0 // pred_fallthru
    _

</llo_original>
